<compile_context>
chip_gen: v7x
topology: tpu7x:2x2x1
jax: 0.10.0
libtpu: 0.0.40
codegen_flags: <defaults>
</compile_context>

<pallas_src>
import functools

import jax
import jax.numpy as jnp
from jax.experimental import pallas as pl
from jax.experimental.pallas import tpu as pltpu


def _pick_row_tile(Hb, row_bytes, target_bytes=4 * 1024 * 1024):
    """Largest dh-tile that divides Hb, keeps a block under ~target_bytes and is
    either Hb itself or a multiple of 8 (keeps block shapes (8,128)-legal and the
    in-kernel leading-dim reshape layout-preserving)."""
    if Hb * row_bytes <= target_bytes:
        return Hb
    cands = [d for d in range(8, Hb, 8) if Hb % d == 0 and d * row_bytes <= target_bytes]
    if cands:
        return max(cands)
    return 8 if Hb % 8 == 0 else Hb


def psi_forward(x, block_size):
    """Pallas implementation of psi_legacy.forward (space-to-depth), NCHW in/out."""
    bs = int(block_size)
    B, C, H, W = x.shape
    assert H % bs == 0 and W % bs == 0, "spatial dims must be divisible by block_size"
    Hb, Wb = H // bs, W // bs
    itemsize = jnp.dtype(x.dtype).itemsize

    # VMEM bytes contributed per output row (dh) of a block, incl. lane padding to 128.
    in_row = C * max(bs * W, 128) * itemsize
    out_row = bs * bs * C * max(Wb, 128) * itemsize
    th = _pick_row_tile(Hb, max(in_row, out_row))

    # Free (row-major) reshape: x3[b, c, dh, h_in*W + w] = x[b, c, dh*bs + h_in, w]
    x3 = x.reshape(B, C, Hb, bs * W)

    def kernel(x_ref, o_ref):
        # x_ref: (C, th, bs*W)   -- th output rows, each carrying its bs input rows
        # o_ref: (bs*bs*C, th, Wb)
        # One-hot lane-gather matrices: sel[w, dw] = 1  iff  w == dw*bs + w_in
        w_idx = jax.lax.broadcasted_iota(jnp.int32, (W, Wb), 0)
        dw_idx = jax.lax.broadcasted_iota(jnp.int32, (W, Wb), 1)
        sels = [(w_idx == dw_idx * bs + w_in).astype(jnp.float32) for w_in in range(bs)]

        for h_in in range(bs):
            # Static contiguous lane slice selects the h_in sub-row; leading-dim merge
            # (th is sublane-aligned) gives a 2-D matmul operand.
            xs = x_ref[:, :, h_in * W:(h_in + 1) * W]            # (C, th, W)
            xs = xs.reshape(C * th, W).astype(jnp.float32)       # (C*th, W)
            for w_in in range(bs):
                # Lane de-interleave via one-hot MXU gather (exact for finite values;
                # the MXU is idle in this mem-bound kernel so this is effectively free).
                y = jnp.dot(
                    xs,
                    sels[w_in],
                    preferred_element_type=jnp.float32,
                    precision=jax.lax.Precision.HIGHEST,
                )                                                # (C*th, Wb)
                d0 = (h_in * bs + w_in) * C
                o_ref[d0:d0 + C, :, :] = y.reshape(C, th, Wb).astype(o_ref.dtype)

    return pl.pallas_call(
        kernel,
        out_shape=jax.ShapeDtypeStruct((B, bs * bs * C, Hb, Wb), x.dtype),
        grid=(B, Hb // th),
        in_specs=[pl.BlockSpec((None, C, th, bs * W), lambda b, t: (b, 0, t, 0))],
        out_specs=pl.BlockSpec((None, bs * bs * C, th, Wb), lambda b, t: (b, 0, t, 0)),
        compiler_params=pltpu.CompilerParams(
            dimension_semantics=("parallel", "parallel"),
            vmem_limit_bytes=32 * 1024 * 1024,
        ),
        cost_estimate=pl.CostEstimate(
            flops=2 * B * C * H * W * Wb,          # one-hot gather MACs on the MXU
            transcendentals=0,
            bytes_accessed=2 * B * C * H * W * itemsize,
        ),
    )(x3)


psi_forward_jit = jax.jit(psi_forward, static_argnums=1)


def psi_reference(x_nchw, bs):
    """Pure-JAX reference reproducing the PyTorch psi_legacy.forward."""
    B, C, H, W = x_nchw.shape
    x = jnp.transpose(x_nchw, (0, 2, 3, 1))                # NHWC
    x = x.reshape(B, H // bs, bs, W // bs, bs, C)
    x = jnp.transpose(x, (0, 1, 3, 2, 4, 5))               # (b, dh, dw, h_in, w_in, c)
    x = x.reshape(B, H // bs, W // bs, bs * bs * C)
    return jnp.transpose(x, (0, 3, 1, 2))                  # NCHW


if __name__ == "__main__":
    key = jax.random.PRNGKey(0)
    block_size = 2
    x = jax.random.normal(key, (2, 4, 16, 16), dtype=jnp.float32)  # NCHW like PyTorch

    out = jax.block_until_ready(psi_forward_jit(x, block_size))
    ref = psi_reference(x, block_size)

    assert out.shape == (2, 4 * block_size * block_size, 8, 8), out.shape
    assert out.dtype == x.dtype
    # The kernel moves data exactly (one-hot MXU gather of finite values); the tolerance
    # only leaves headroom for MXU f32-emulation differences across generations.  Any
    # indexing error would show up as O(1) mismatches, far outside this tolerance.
    assert bool(jnp.allclose(out, ref, atol=2e-2, rtol=2e-2)), "Pallas output mismatch vs reference"

    print("KERNEL_OK")
</pallas_src>

<mosaic_0001>
module attributes {stable_mosaic.version = 11 : i64} {
  func.func @kernel(%arg0: i32, %arg1: i32, %arg2: memref<1x4x8x32xf32, #tpu.memory_space<vmem>>, %arg3: memref<1x16x8x8xf32, #tpu.memory_space<vmem>>) attributes {dimension_semantics = [#tpu.dimension_semantics<parallel>, #tpu.dimension_semantics<parallel>], iteration_bounds = array<i64: 2, 1>, scalar_prefetch = 0 : i64, scratch_operands = 0 : i64, tpu.core_type = #tpu.core_type<tc>, window_params = [{transform_indices = @transform_0, window_bounds = array<i64: 1, 4, 8, 32>}, {transform_indices = @transform_1, window_bounds = array<i64: 1, 16, 8, 8>}]} {
    %0 = tpu.iota {dimensions = array<i32: 0>} : vector<16x8xi32>
    %1 = tpu.iota {dimensions = array<i32: 1>} : vector<16x8xi32>
    %c2_i32 = arith.constant 2 : i32
    %2 = vector.broadcast %c2_i32 : i32 to vector<16x8xi32>
    %3 = arith.muli %1, %2 : vector<16x8xi32>
    %c0_i32 = arith.constant 0 : i32
    %4 = vector.broadcast %c0_i32 : i32 to vector<16x8xi32>
    %5 = arith.addi %3, %4 : vector<16x8xi32>
    %6 = arith.cmpi eq, %0, %5 : vector<16x8xi32>
    %7 = arith.extui %6 : vector<16x8xi1> to vector<16x8xi32>
    %8 = arith.sitofp %7 : vector<16x8xi32> to vector<16x8xf32>
    %c2_i32_0 = arith.constant 2 : i32
    %9 = vector.broadcast %c2_i32_0 : i32 to vector<16x8xi32>
    %10 = arith.muli %1, %9 : vector<16x8xi32>
    %c1_i32 = arith.constant 1 : i32
    %11 = vector.broadcast %c1_i32 : i32 to vector<16x8xi32>
    %12 = arith.addi %10, %11 : vector<16x8xi32>
    %13 = arith.cmpi eq, %0, %12 : vector<16x8xi32>
    %14 = arith.extui %13 : vector<16x8xi1> to vector<16x8xi32>
    %15 = arith.sitofp %14 : vector<16x8xi32> to vector<16x8xf32>
    %c0 = arith.constant 0 : index
    %c0_1 = arith.constant 0 : index
    %c0_2 = arith.constant 0 : index
    %c0_3 = arith.constant 0 : index
    %16 = vector.load %arg2[%c0, %c0_1, %c0_2, %c0_3] : memref<1x4x8x32xf32, #tpu.memory_space<vmem>>, vector<1x4x8x16xf32>
    %17 = vector.shape_cast %16 : vector<1x4x8x16xf32> to vector<4x8x16xf32>
    %18 = vector.shape_cast %17 : vector<4x8x16xf32> to vector<32x16xf32>
    %cst = arith.constant dense<0.000000e+00> : vector<32x8xf32>
    %19 = tpu.matmul %18, %8, %cst {dimension_numbers = #tpu.dot_dimension_numbers<[1], [0], [0], [1], [0, 0, 1, 1], [], []>, precision = #tpu.contract_precision<fp32>} : vector<32x16xf32>, vector<16x8xf32>, vector<32x8xf32> -> vector<32x8xf32>
    %20 = vector.shape_cast %19 : vector<32x8xf32> to vector<4x8x8xf32>
    %c0_4 = arith.constant 0 : index
    %c0_5 = arith.constant 0 : index
    %c0_6 = arith.constant 0 : index
    %c0_7 = arith.constant 0 : index
    %21 = vector.load %arg3[%c0_4, %c0_5, %c0_6, %c0_7] : memref<1x16x8x8xf32, #tpu.memory_space<vmem>>, vector<1x4x8x8xf32>
    %22 = vector.shape_cast %21 : vector<1x4x8x8xf32> to vector<4x8x8xf32>
    %23 = vector.shape_cast %20 : vector<4x8x8xf32> to vector<1x4x8x8xf32>
    tpu.vector_store %arg3[%c0_4, %c0_5, %c0_6, %c0_7], %23 {strides = array<i32>} : memref<1x16x8x8xf32, #tpu.memory_space<vmem>>, vector<1x4x8x8xf32>,
    %cst_8 = arith.constant dense<0.000000e+00> : vector<32x8xf32>
    %24 = tpu.matmul %18, %15, %cst_8 {dimension_numbers = #tpu.dot_dimension_numbers<[1], [0], [0], [1], [0, 0, 1, 1], [], []>, precision = #tpu.contract_precision<fp32>} : vector<32x16xf32>, vector<16x8xf32>, vector<32x8xf32> -> vector<32x8xf32>
    %25 = vector.shape_cast %24 : vector<32x8xf32> to vector<4x8x8xf32>
    %c0_9 = arith.constant 0 : index
    %c4 = arith.constant 4 : index
    %c0_10 = arith.constant 0 : index
    %c0_11 = arith.constant 0 : index
    %26 = vector.load %arg3[%c0_9, %c4, %c0_10, %c0_11] : memref<1x16x8x8xf32, #tpu.memory_space<vmem>>, vector<1x4x8x8xf32>
    %27 = vector.shape_cast %26 : vector<1x4x8x8xf32> to vector<4x8x8xf32>
    %28 = vector.shape_cast %25 : vector<4x8x8xf32> to vector<1x4x8x8xf32>
    tpu.vector_store %arg3[%c0_9, %c4, %c0_10, %c0_11], %28 {strides = array<i32>} : memref<1x16x8x8xf32, #tpu.memory_space<vmem>>, vector<1x4x8x8xf32>,
    %c0_12 = arith.constant 0 : index
    %c0_13 = arith.constant 0 : index
    %c0_14 = arith.constant 0 : index
    %c16 = arith.constant 16 : index
    %29 = vector.load %arg2[%c0_12, %c0_13, %c0_14, %c16] : memref<1x4x8x32xf32, #tpu.memory_space<vmem>>, vector<1x4x8x16xf32>
    %30 = vector.shape_cast %29 : vector<1x4x8x16xf32> to vector<4x8x16xf32>
    %31 = vector.shape_cast %30 : vector<4x8x16xf32> to vector<32x16xf32>
    %cst_15 = arith.constant dense<0.000000e+00> : vector<32x8xf32>
    %32 = tpu.matmul %31, %8, %cst_15 {dimension_numbers = #tpu.dot_dimension_numbers<[1], [0], [0], [1], [0, 0, 1, 1], [], []>, precision = #tpu.contract_precision<fp32>} : vector<32x16xf32>, vector<16x8xf32>, vector<32x8xf32> -> vector<32x8xf32>
    %33 = vector.shape_cast %32 : vector<32x8xf32> to vector<4x8x8xf32>
    %c0_16 = arith.constant 0 : index
    %c8 = arith.constant 8 : index
    %c0_17 = arith.constant 0 : index
    %c0_18 = arith.constant 0 : index
    %34 = vector.load %arg3[%c0_16, %c8, %c0_17, %c0_18] : memref<1x16x8x8xf32, #tpu.memory_space<vmem>>, vector<1x4x8x8xf32>
    %35 = vector.shape_cast %34 : vector<1x4x8x8xf32> to vector<4x8x8xf32>
    %36 = vector.shape_cast %33 : vector<4x8x8xf32> to vector<1x4x8x8xf32>
    tpu.vector_store %arg3[%c0_16, %c8, %c0_17, %c0_18], %36 {strides = array<i32>} : memref<1x16x8x8xf32, #tpu.memory_space<vmem>>, vector<1x4x8x8xf32>,
    %cst_19 = arith.constant dense<0.000000e+00> : vector<32x8xf32>
    %37 = tpu.matmul %31, %15, %cst_19 {dimension_numbers = #tpu.dot_dimension_numbers<[1], [0], [0], [1], [0, 0, 1, 1], [], []>, precision = #tpu.contract_precision<fp32>} : vector<32x16xf32>, vector<16x8xf32>, vector<32x8xf32> -> vector<32x8xf32>
    %38 = vector.shape_cast %37 : vector<32x8xf32> to vector<4x8x8xf32>
    %c0_20 = arith.constant 0 : index
    %c12 = arith.constant 12 : index
    %c0_21 = arith.constant 0 : index
    %c0_22 = arith.constant 0 : index
    %39 = vector.load %arg3[%c0_20, %c12, %c0_21, %c0_22] : memref<1x16x8x8xf32, #tpu.memory_space<vmem>>, vector<1x4x8x8xf32>
    %40 = vector.shape_cast %39 : vector<1x4x8x8xf32> to vector<4x8x8xf32>
    %41 = vector.shape_cast %38 : vector<4x8x8xf32> to vector<1x4x8x8xf32>
    tpu.vector_store %arg3[%c0_20, %c12, %c0_21, %c0_22], %41 {strides = array<i32>} : memref<1x16x8x8xf32, #tpu.memory_space<vmem>>, vector<1x4x8x8xf32>,
    return
  }
  func.func @transform_0(%arg0: i32, %arg1: i32) -> (i32, i32, i32, i32) {
    %c0_i32 = arith.constant 0 : i32
    %c0_i32_0 = arith.constant 0 : i32
    %c0_i32_1 = arith.constant 0 : i32
    return %arg0, %c0_i32, %arg1, %c0_i32_0 : i32, i32, i32, i32
  }
  func.func @transform_1(%arg0: i32, %arg1: i32) -> (i32, i32, i32, i32) {
    %c0_i32 = arith.constant 0 : i32
    %c0_i32_0 = arith.constant 0 : i32
    %c0_i32_1 = arith.constant 0 : i32
    return %arg0, %c0_i32, %arg1, %c0_i32_0 : i32, i32, i32, i32
  }
}

</mosaic_0001>

<llo_original>
// kernel: psi_forward.1
$region0: #{psi_forward.1}
  #allocation0 [shape = 'u32[]', space=smem, size = 0x4, offset = 0x4, fixed_abs, tag = 'smem constant byte address 0x4 - core index']
  #allocation1 [shape = 'u32[144,128]{1,0:T(1,128)}', space=vmem, size = 0x12000, scoped, tag = 'internal scratch']
  %s0 = inlined_call_operand.vmem [shape: f32[2,4,8,32], index: 0, kind: input, shape index: {}]
  %s1 = inlined_call_operand.vmem [shape: f32[2,16,8,8], index: 1, kind: output, shape index: {}]
  %s2 = sld [smem:[#allocation0]]
  $region37: #{psi_forward.1} parent=0
    _
  %s4 = ssub.s32 1, %s2
  %s5 = scalar_select 0, %s4, %s2
  loop: start=0, step=1, limit=4
  $region2: #{psi_forward.1} parent=0 // loop_pre_header
    _
  $region3: #{psi_forward.1} parent=0 // loop_header
    %s7 = sphi 0, %s11
    %p8 = scmp.ge.s32.totalorder %s7, 4
    %s14 = sphi 0, %s26
    %s15 = sphi 0, %s22
    %s16 = sphi 0, %s14
    %s17 = sphi 0, %s15
    %s18 = sphi 0, %s16
    %s19 = sphi 0, %s17
    %s31 = sphi 0, %s33
    %s34 = sphi 0, %s31
    %s35 = sphi 0, %s34
    %s51 = sphi 0, %s35
    %s59 = sphi 0, %s61
    %s62 = sphi 0, %s59
    %s63 = sphi 0, %s62
    %s79 = sphi 0, %s63
  $region4: #{psi_forward.1} parent=0 // loop_header_branch
    %10 = sbr.rel (%p8) target = $region8
  $region5: #{psi_forward.1} parent=0 // loop_body
    %s12 = ssub.s32 %s7, 1
    %s13 = ssub.s32 %s7, 2
    %s20 = sadd.s32 1, %s15
    %p21 = scmp.ge.s32.totalorder %s20, 1
    %s22 = scalar_select %p21, 0, %s20
    %s23 = sadd.s32 1, %s14
    %s24 = scalar_select %p21, %s23, %s14
    %p25 = scmp.ge.s32.totalorder %s24, 2
    %s26 = scalar_select %p25, 0, %s24
    %s27 = ssub.s32 %s14, %s26
    %s28 = ssub.s32 %s15, %s22
    %s29 = sor.u32 %s27, %s28
    %p30 = scmp.eq.s32.totalorder %s29, 0
    %s32 = sadd.s32 %s31, 1
    %s33 = scalar_select %p30, %s31, %s32
    %p36 = pneg %p30
    %p37 = scmp.eq.s32.totalorder %s7, 1
    %p38 = por %p36, %p37
    %p39 = scmp.ne.s32.totalorder %s31, %s34
    %p40 = scmp.eq.s32.totalorder %s7, 0
    %p41 = por %p39, %p40
    %p42 = scmp.ne.s32.totalorder %s31, %s34
    %p43 = scmp.eq.s32.totalorder %s12, 1
    %p44 = por %p42, %p43
    %p45 = scmp.ne.s32.totalorder %s34, %s35
    %p46 = scmp.eq.s32.totalorder %s12, 0
    %p47 = por %p45, %p46
    %p48 = scmp.ne.s32.totalorder %s34, %s35
    %p49 = scmp.eq.s32.totalorder %s13, 1
    %p50 = por %p48, %p49
    %p52 = scmp.ne.s32.totalorder %s35, %s51
    %p53 = scmp.eq.s32.totalorder %s13, 0
    %p54 = por %p52, %p53
    %s55 = ssub.s32 %s14, %s26
    %s56 = ssub.s32 %s15, %s22
    %s57 = sor.u32 %s55, %s56
    %p58 = scmp.eq.s32.totalorder %s57, 0
    %s60 = sadd.s32 %s59, 1
    %s61 = scalar_select %p58, %s59, %s60
    %p64 = pneg %p58
    %p65 = scmp.eq.s32.totalorder %s7, 1
    %p66 = por %p64, %p65
    %p67 = scmp.ne.s32.totalorder %s59, %s62
    %p68 = scmp.eq.s32.totalorder %s7, 0
    %p69 = por %p67, %p68
    %p70 = scmp.ne.s32.totalorder %s59, %s62
    %p71 = scmp.eq.s32.totalorder %s12, 1
    %p72 = por %p70, %p71
    %p73 = scmp.ne.s32.totalorder %s62, %s63
    %p74 = scmp.eq.s32.totalorder %s12, 0
    %p75 = por %p73, %p74
    %p76 = scmp.ne.s32.totalorder %s62, %s63
    %p77 = scmp.eq.s32.totalorder %s13, 1
    %p78 = por %p76, %p77
    %p80 = scmp.ne.s32.totalorder %s63, %s79
    %p81 = scmp.eq.s32.totalorder %s13, 0
    %p82 = por %p80, %p81
    %p83 = scmp.le.s32.totalorder 1, %s7
    %p84 = scmp.lt.s32.totalorder %s7, 3
    %p85 = pnand %p83, %p84
    %p86 = pneg %p85
    // Predicated region
    $region9: #{psi_forward.1} parent=5 // pred_check
      _
    $region10: #{psi_forward.1} parent=5 // pred_check_branch
      %88 = sbr.rel (%p85) target = $region12
    $region11: #{psi_forward.1} parent=5 // pred_region
      %s89 = ssub.s32 %s7, 1
    $region12: #{psi_forward.1} parent=5 // pred_fallthru
      _
    %p90 = scmp.lt.s32.totalorder %s7, 2
    // Predicated region
    $region13: #{psi_forward.1} parent=5 // pred_check
      %p91 = pneg %p90
    $region14: #{psi_forward.1} parent=5 // pred_check_branch
      %93 = sbr.rel (%p91) target = $region16
    $region15: #{psi_forward.1} parent=5 // pred_region
      // Predicated region
      $region17: #{psi_forward.1} parent=15 // pred_check
        %p94 = pneg %p41
      $region18: #{psi_forward.1} parent=15 // pred_check_branch
        %96 = sbr.rel (%p94) target = $region20
      $region19: #{psi_forward.1} parent=15 // pred_region
        %p97 = scmp.lt.s32.totalorder %s14, 1
        %s98 = scalar_select %p97, %s14, 1
        %p99 = scmp.lt.s32.totalorder %s15, 0
        %s100 = scalar_select %p99, %s15, 0
        %s101 = smul.addr %s98, 4
        %s102 = sadd.s32 %s100, %s101
        %s103 = smul.addr %s102, 8
        %s104 = scalar_lea.vmem %s0, %s103
      $region20: #{psi_forward.1} parent=15 // pred_fallthru
        _
    $region16: #{psi_forward.1} parent=5 // pred_fallthru
      _
    %p105 = scmp.le.s32.totalorder 1, %s7
    %p106 = scmp.lt.s32.totalorder %s7, 3
    %p107 = pnand %p105, %p106
    %p108 = pneg %p107
    // Predicated region
    $region21: #{psi_forward.1} parent=5 // pred_check
      _
    $region22: #{psi_forward.1} parent=5 // pred_check_branch
      %110 = sbr.rel (%p107) target = $region24
    $region23: #{psi_forward.1} parent=5 // pred_region
      %s111 = ssub.s32 %s7, 1
      %p112 = scmp.lt.s32.totalorder %s16, 1
      %s113 = scalar_select %p112, %s16, 1
      %p114 = scmp.lt.s32.totalorder %s17, 0
      %s115 = scalar_select %p114, %s17, 0
      %s116 = smul.addr %s113, 4
      %s117 = sadd.s32 %s115, %s116
      %s118 = smul.addr %s117, 8
      %s119 = scalar_lea.vmem %s0, %s118
      %p120 = pneg %p47
      %p121 = pneg %p44
      %p122 = pneg %p75
      %p123 = pneg %p72
      %p124 = scmp.lt.s32.totalorder %s16, 1
      %s125 = scalar_select %p124, %s16, 1
      %p126 = scmp.lt.s32.totalorder %s17, 0
      %s127 = scalar_select %p126, %s17, 0
      %s128 = smul.addr %s125, 16
      %s129 = sadd.s32 %s127, %s128
      %s130 = smul.addr %s129, 8
      %s131 = scalar_lea.vmem %s1, %s130
      %p132 = scmp.lt.s32.totalorder %s16, 1
      %s133 = scalar_select %p132, %s16, 1
      %p134 = scmp.lt.s32.totalorder %s17, 0
      %s135 = scalar_select %p134, %s17, 0
      %s136 = smul.addr %s133, 4
      %s137 = sadd.s32 %s135, %s136
      %s138 = smul.addr %s137, 8
      %s139 = scalar_lea.vmem %s0, %s138
      %p140 = scmp.lt.s32.totalorder %s16, 1
      %s141 = scalar_select %p140, %s16, 1
      %p142 = scmp.lt.s32.totalorder %s17, 0
      %s143 = scalar_select %p142, %s17, 0
      %s144 = smul.addr %s141, 16
      %s145 = sadd.s32 %s143, %s144
      %s146 = smul.addr %s145, 8
      %s147 = scalar_lea.vmem %s1, %s146
      %v148 = vlaneseq
      %v149 = vshrl.u32 %v148, 7
      %v150 = vadd.s32 %v149, 8
      %v151 = vlaneseq
      %v152 = vand.u32 %v151, 127
      %v153 = vmul.u32 %v152, 2
      %vm154 = vcmp.eq.s32.totalorder %v149, %v153
      %vm155 = vcmp.eq.s32.totalorder %v150, %v153
      %v156 = vsel %vm154, 1, 0
      %v157 = vsel %vm155, 1, 0
      %v158 = vcvt.s32.f32 %v156
      %v159 = vcvt.s32.f32 %v157
      %v160 = vadd.s32 %v153, 1
      %vm161 = vcmp.eq.s32.totalorder %v149, %v160
      %vm162 = vcmp.eq.s32.totalorder %v150, %v160
      %v163 = vsel %vm161, 1, 0
      %v164 = vsel %vm162, 1, 0
      %v165 = vcvt.s32.f32 %v163
      %v166 = vcvt.s32.f32 %v164
      %v167 = vld [vmem:[%s139] sm:$0xff]
      %v168 = vld [vmem:[%s139 + $0x8] sm:$0xff]
      %v169 = vld [vmem:[%s139 + $0x10] sm:$0xff]
      %v170 = vld [vmem:[%s139 + $0x18] sm:$0xff]
      %vm171 = vcmask 130048
      %v173 = vsel %vm171, %v167, 0
      %v176 = vsel %vm171, %v168, 0
      %v179 = vsel %vm171, %v169, 0
      %v182 = vsel %vm171, %v170, 0
      %184 = vmatprep.subr.mxu0 0.0
      %v185 = vand.u32 %v158, 4294901760
      %186 = vmatpush1.msra.mxu0 %v185
      %187 = vmatprep.subr.mxu0 0.0
      %v188 = vand.u32 %v159, 4294901760
      %189 = vmatpush1.msra.mxu0 %v188
      %190 = vmatprep.subr.mxu0 0.0
      %191 = vmatpush1.msra.mxu0 0.0
      %192 = vmatprep.subr.mxu0 0.0
      %193 = vmatpush1.msra.mxu0 0.0
      %194 = vmatprep.subr.mxu0 0.0
      %195 = vmatpush1.msra.mxu0 0.0
      %196 = vmatprep.subr.mxu0 0.0
      %197 = vmatpush1.msra.mxu0 0.0
      %198 = vmatprep.subr.mxu0 0.0
      %199 = vmatpush1.msra.mxu0 0.0
      %200 = vmatprep.subr.mxu0 0.0
      %201 = vmatpush1.msra.mxu0 0.0
      %202 = vmatprep.subr.mxu0 0.0
      %203 = vmatpush1.msra.mxu0 0.0
      %204 = vmatprep.subr.mxu0 0.0
      %205 = vmatpush1.msra.mxu0 0.0
      %206 = vmatprep.subr.mxu0 0.0
      %207 = vmatpush1.msra.mxu0 0.0
      %208 = vmatprep.subr.mxu0 0.0
      %209 = vmatpush1.msra.mxu0 0.0
      %210 = vmatprep.subr.mxu0 0.0
      %211 = vmatpush1.msra.mxu0 0.0
      %212 = vmatprep.subr.mxu0 0.0
      %213 = vmatpush1.msra.mxu0 0.0
      %214 = vmatprep.subr.mxu0 0.0
      %215 = vmatpush1.msra.mxu0 0.0
      %216 = vmatprep.subr.mxu0 0.0
      %217 = vmatpush1.msra.mxu0 0.0
      %218 = vmatprep.subr.mxu0 0.0
      %219 = vmatpush1.msra.mxu0 0.0
      %220 = vmatprep.subr.mxu0 0.0
      %221 = vmatpush1.msra.mxu0 0.0
      %222 = vmatprep.subr.mxu0 0.0
      %223 = vmatpush1.msra.mxu0 0.0
      %224 = vmatprep.subr.mxu0 0.0
      %225 = vmatpush1.msra.mxu0 0.0
      %226 = vmatprep.subr.mxu0 0.0
      %227 = vmatpush1.msra.mxu0 0.0
      %228 = vmatprep.subr.mxu0 0.0
      %229 = vmatpush1.msra.mxu0 0.0
      %230 = vmatprep.subr.mxu0 0.0
      %231 = vmatpush1.msra.mxu0 0.0
      %232 = vmatprep.subr.mxu0 0.0
      %233 = vmatpush1.msra.mxu0 0.0
      %234 = vmatprep.subr.mxu0 0.0
      %235 = vmatpush1.msra.mxu0 0.0
      %236 = vmatprep.subr.mxu0 0.0
      %237 = vmatpush1.msra.mxu0 0.0
      %238 = vmatprep.subr.mxu0 0.0
      %239 = vmatpush1.msra.mxu0 0.0
      %240 = vmatprep.subr.mxu0 0.0
      %241 = vmatpush1.msra.mxu0 0.0
      %242 = vmatprep.subr.mxu0 0.0
      %243 = vmatpush1.msra.mxu0 0.0
      %244 = vmatprep.subr.mxu0 0.0
      %245 = vmatpush1.msra.mxu0 0.0
      %246 = vmatprep.subr.mxu0 0.0
      %247 = vmatpush1.msra.mxu0 0.0
      %248 = vmatprep.subr.mxu0 0.0
      %249 = vmatpush1.msra.mxu0 0.0
      %250 = vmatprep.mubr.f32.mxu0 0.0
      %v251 = vand.u32 %v173, 4294901760
      %v252 = vsub.f32 %v173, %v251
      %v253 = vand.u32 %v252, 4294901760
      %v254 = vsub.f32 %v252, %v253
      %v255 = vand.u32 %v254, 4294901760
      %256 = vmatmul.mubr.f32.gmra.mrb[0].mxu0 %v255
      %v257 = vpop.f32.mrb[0].mxu0
      %v258 = vadd.f32 0.0, %v257
      %v259 = vpop.f32.mrb[0].mxu0
      %260 = vmatprep.mubr.f32.mxu0 0.0
      %v261 = vand.u32 %v176, 4294901760
      %v262 = vsub.f32 %v176, %v261
      %v263 = vand.u32 %v262, 4294901760
      %v264 = vsub.f32 %v262, %v263
      %v265 = vand.u32 %v264, 4294901760
      %266 = vmatmul.mubr.f32.gmra.mrb[0].mxu0 %v265
      %v267 = vpop.f32.mrb[0].mxu0
      %v268 = vadd.f32 0.0, %v267
      %v269 = vpop.f32.mrb[0].mxu0
      %270 = vmatprep.mubr.f32.mxu0 0.0
      %v271 = vand.u32 %v179, 4294901760
      %v272 = vsub.f32 %v179, %v271
      %v273 = vand.u32 %v272, 4294901760
      %v274 = vsub.f32 %v272, %v273
      %v275 = vand.u32 %v274, 4294901760
      %276 = vmatmul.mubr.f32.gmra.mrb[0].mxu0 %v275
      %v277 = vpop.f32.mrb[0].mxu0
      %v278 = vadd.f32 0.0, %v277
      %v279 = vpop.f32.mrb[0].mxu0
      %280 = vmatprep.mubr.f32.mxu0 0.0
      %v281 = vand.u32 %v182, 4294901760
      %v282 = vsub.f32 %v182, %v281
      %v283 = vand.u32 %v282, 4294901760
      %v284 = vsub.f32 %v282, %v283
      %v285 = vand.u32 %v284, 4294901760
      %286 = vmatmul.mubr.f32.gmra.mrb[0].mxu0 %v285
      %v287 = vpop.f32.mrb[0].mxu0
      %v288 = vadd.f32 0.0, %v287
      %v289 = vpop.f32.mrb[0].mxu0
      %290 = vdwg.mxu0
      %291 = vmatprep.subr.mxu0 0.0
      %v292 = vand.u32 %v158, 4294901760
      %v293 = vsub.f32 %v158, %v292
      %v294 = vand.u32 %v293, 4294901760
      %v295 = vsub.f32 %v293, %v294
      %v296 = vand.u32 %v295, 4294901760
      %297 = vmatpush1.msra.mxu0 %v296
      %298 = vmatprep.subr.mxu0 0.0
      %v299 = vand.u32 %v159, 4294901760
      %v300 = vsub.f32 %v159, %v299
      %v301 = vand.u32 %v300, 4294901760
      %v302 = vsub.f32 %v300, %v301
      %v303 = vand.u32 %v302, 4294901760
      %304 = vmatpush1.msra.mxu0 %v303
      %305 = vmatprep.subr.mxu0 0.0
      %306 = vmatpush1.msra.mxu0 0.0
      %307 = vmatprep.subr.mxu0 0.0
      %308 = vmatpush1.msra.mxu0 0.0
      %309 = vmatprep.subr.mxu0 0.0
      %310 = vmatpush1.msra.mxu0 0.0
      %311 = vmatprep.subr.mxu0 0.0
      %312 = vmatpush1.msra.mxu0 0.0
      %313 = vmatprep.subr.mxu0 0.0
      %314 = vmatpush1.msra.mxu0 0.0
      %315 = vmatprep.subr.mxu0 0.0
      %316 = vmatpush1.msra.mxu0 0.0
      %317 = vmatprep.subr.mxu0 0.0
      %318 = vmatpush1.msra.mxu0 0.0
      %319 = vmatprep.subr.mxu0 0.0
      %320 = vmatpush1.msra.mxu0 0.0
      %321 = vmatprep.subr.mxu0 0.0
      %322 = vmatpush1.msra.mxu0 0.0
      %323 = vmatprep.subr.mxu0 0.0
      %324 = vmatpush1.msra.mxu0 0.0
      %325 = vmatprep.subr.mxu0 0.0
      %326 = vmatpush1.msra.mxu0 0.0
      %327 = vmatprep.subr.mxu0 0.0
      %328 = vmatpush1.msra.mxu0 0.0
      %329 = vmatprep.subr.mxu0 0.0
      %330 = vmatpush1.msra.mxu0 0.0
      %331 = vmatprep.subr.mxu0 0.0
      %332 = vmatpush1.msra.mxu0 0.0
      %333 = vmatprep.subr.mxu0 0.0
      %334 = vmatpush1.msra.mxu0 0.0
      %335 = vmatprep.subr.mxu0 0.0
      %336 = vmatpush1.msra.mxu0 0.0
      %337 = vmatprep.subr.mxu0 0.0
      %338 = vmatpush1.msra.mxu0 0.0
      %339 = vmatprep.subr.mxu0 0.0
      %340 = vmatpush1.msra.mxu0 0.0
      %341 = vmatprep.subr.mxu0 0.0
      %342 = vmatpush1.msra.mxu0 0.0
      %343 = vmatprep.subr.mxu0 0.0
      %344 = vmatpush1.msra.mxu0 0.0
      %345 = vmatprep.subr.mxu0 0.0
      %346 = vmatpush1.msra.mxu0 0.0
      %347 = vmatprep.subr.mxu0 0.0
      %348 = vmatpush1.msra.mxu0 0.0
      %349 = vmatprep.subr.mxu0 0.0
      %350 = vmatpush1.msra.mxu0 0.0
      %351 = vmatprep.subr.mxu0 0.0
      %352 = vmatpush1.msra.mxu0 0.0
      %353 = vmatprep.subr.mxu0 0.0
      %354 = vmatpush1.msra.mxu0 0.0
      %355 = vmatprep.subr.mxu0 0.0
      %356 = vmatpush1.msra.mxu0 0.0
      %357 = vmatprep.subr.mxu0 0.0
      %358 = vmatpush1.msra.mxu0 0.0
      %359 = vmatprep.subr.mxu0 0.0
      %360 = vmatpush1.msra.mxu0 0.0
      %361 = vmatprep.subr.mxu0 0.0
      %362 = vmatpush1.msra.mxu0 0.0
      %363 = vmatprep.subr.mxu0 0.0
      %364 = vmatpush1.msra.mxu0 0.0
      %365 = vmatprep.mubr.f32.mxu0 0.0
      %v366 = vand.u32 %v173, 4294901760
      %367 = vmatmul.mubr.f32.gmra.mrb[0].mxu0 %v366
      %v368 = vpop.f32.mrb[0].mxu0
      %v369 = vadd.f32 %v258, %v368
      %v370 = vpop.f32.mrb[0].mxu0
      %371 = vmatprep.mubr.f32.mxu0 0.0
      %v372 = vand.u32 %v176, 4294901760
      %373 = vmatmul.mubr.f32.gmra.mrb[0].mxu0 %v372
      %v374 = vpop.f32.mrb[0].mxu0
      %v375 = vadd.f32 %v268, %v374
      %v376 = vpop.f32.mrb[0].mxu0
      %377 = vmatprep.mubr.f32.mxu0 0.0
      %v378 = vand.u32 %v179, 4294901760
      %379 = vmatmul.mubr.f32.gmra.mrb[0].mxu0 %v378
      %v380 = vpop.f32.mrb[0].mxu0
      %v381 = vadd.f32 %v278, %v380
      %v382 = vpop.f32.mrb[0].mxu0
      %383 = vmatprep.mubr.f32.mxu0 0.0
      %v384 = vand.u32 %v182, 4294901760
      %385 = vmatmul.mubr.f32.gmra.mrb[0].mxu0 %v384
      %v386 = vpop.f32.mrb[0].mxu0
      %v387 = vadd.f32 %v288, %v386
      %v388 = vpop.f32.mrb[0].mxu0
      %389 = vdwg.mxu0
      %390 = vmatprep.subr.mxu0 0.0
      %v391 = vand.u32 %v158, 4294901760
      %v392 = vsub.f32 %v158, %v391
      %393 = vmatpush1.msra.mxu0 %v392
      %394 = vmatprep.subr.mxu0 0.0
      %v395 = vand.u32 %v159, 4294901760
      %v396 = vsub.f32 %v159, %v395
      %397 = vmatpush1.msra.mxu0 %v396
      %398 = vmatprep.subr.mxu0 0.0
      %399 = vmatpush1.msra.mxu0 0.0
      %400 = vmatprep.subr.mxu0 0.0
      %401 = vmatpush1.msra.mxu0 0.0
      %402 = vmatprep.subr.mxu0 0.0
      %403 = vmatpush1.msra.mxu0 0.0
      %404 = vmatprep.subr.mxu0 0.0
      %405 = vmatpush1.msra.mxu0 0.0
      %406 = vmatprep.subr.mxu0 0.0
      %407 = vmatpush1.msra.mxu0 0.0
      %408 = vmatprep.subr.mxu0 0.0
      %409 = vmatpush1.msra.mxu0 0.0
      %410 = vmatprep.subr.mxu0 0.0
      %411 = vmatpush1.msra.mxu0 0.0
      %412 = vmatprep.subr.mxu0 0.0
      %413 = vmatpush1.msra.mxu0 0.0
      %414 = vmatprep.subr.mxu0 0.0
      %415 = vmatpush1.msra.mxu0 0.0
      %416 = vmatprep.subr.mxu0 0.0
      %417 = vmatpush1.msra.mxu0 0.0
      %418 = vmatprep.subr.mxu0 0.0
      %419 = vmatpush1.msra.mxu0 0.0
      %420 = vmatprep.subr.mxu0 0.0
      %421 = vmatpush1.msra.mxu0 0.0
      %422 = vmatprep.subr.mxu0 0.0
      %423 = vmatpush1.msra.mxu0 0.0
      %424 = vmatprep.subr.mxu0 0.0
      %425 = vmatpush1.msra.mxu0 0.0
      %426 = vmatprep.subr.mxu0 0.0
      %427 = vmatpush1.msra.mxu0 0.0
      %428 = vmatprep.subr.mxu0 0.0
      %429 = vmatpush1.msra.mxu0 0.0
      %430 = vmatprep.subr.mxu0 0.0
      %431 = vmatpush1.msra.mxu0 0.0
      %432 = vmatprep.subr.mxu0 0.0
      %433 = vmatpush1.msra.mxu0 0.0
      %434 = vmatprep.subr.mxu0 0.0
      %435 = vmatpush1.msra.mxu0 0.0
      %436 = vmatprep.subr.mxu0 0.0
      %437 = vmatpush1.msra.mxu0 0.0
      %438 = vmatprep.subr.mxu0 0.0
      %439 = vmatpush1.msra.mxu0 0.0
      %440 = vmatprep.subr.mxu0 0.0
      %441 = vmatpush1.msra.mxu0 0.0
      %442 = vmatprep.subr.mxu0 0.0
      %443 = vmatpush1.msra.mxu0 0.0
      %444 = vmatprep.subr.mxu0 0.0
      %445 = vmatpush1.msra.mxu0 0.0
      %446 = vmatprep.subr.mxu0 0.0
      %447 = vmatpush1.msra.mxu0 0.0
      %448 = vmatprep.subr.mxu0 0.0
      %449 = vmatpush1.msra.mxu0 0.0
      %450 = vmatprep.subr.mxu0 0.0
      %451 = vmatpush1.msra.mxu0 0.0
      %452 = vmatprep.subr.mxu0 0.0
      %453 = vmatpush1.msra.mxu0 0.0
      %454 = vmatprep.subr.mxu0 0.0
      %455 = vmatpush1.msra.mxu0 0.0
      %456 = vmatprep.subr.mxu0 0.0
      %457 = vmatpush1.msra.mxu0 0.0
      %458 = vmatprep.mubr.f32.mxu0 0.0
      %v459 = vand.u32 %v173, 4294901760
      %v460 = vsub.f32 %v173, %v459
      %461 = vmatmul.mubr.f32.gmra.mrb[0].mxu0 %v460
      %v462 = vpop.f32.mrb[0].mxu0
      %v463 = vadd.f32 %v369, %v462
      %v464 = vpop.f32.mrb[0].mxu0
      %465 = vmatprep.mubr.f32.mxu0 0.0
      %v466 = vand.u32 %v176, 4294901760
      %v467 = vsub.f32 %v176, %v466
      %468 = vmatmul.mubr.f32.gmra.mrb[0].mxu0 %v467
      %v469 = vpop.f32.mrb[0].mxu0
      %v470 = vadd.f32 %v375, %v469
      %v471 = vpop.f32.mrb[0].mxu0
      %472 = vmatprep.mubr.f32.mxu0 0.0
      %v473 = vand.u32 %v179, 4294901760
      %v474 = vsub.f32 %v179, %v473
      %475 = vmatmul.mubr.f32.gmra.mrb[0].mxu0 %v474
      %v476 = vpop.f32.mrb[0].mxu0
      %v477 = vadd.f32 %v381, %v476
      %v478 = vpop.f32.mrb[0].mxu0
      %479 = vmatprep.mubr.f32.mxu0 0.0
      %v480 = vand.u32 %v182, 4294901760
      %v481 = vsub.f32 %v182, %v480
      %482 = vmatmul.mubr.f32.gmra.mrb[0].mxu0 %v481
      %v483 = vpop.f32.mrb[0].mxu0
      %v484 = vadd.f32 %v387, %v483
      %v485 = vpop.f32.mrb[0].mxu0
      %486 = vdwg.mxu0
      %487 = vmatprep.subr.mxu0 0.0
      %v488 = vand.u32 %v158, 4294901760
      %489 = vmatpush1.msra.mxu0 %v488
      %490 = vmatprep.subr.mxu0 0.0
      %v491 = vand.u32 %v159, 4294901760
      %492 = vmatpush1.msra.mxu0 %v491
      %493 = vmatprep.subr.mxu0 0.0
      %494 = vmatpush1.msra.mxu0 0.0
      %495 = vmatprep.subr.mxu0 0.0
      %496 = vmatpush1.msra.mxu0 0.0
      %497 = vmatprep.subr.mxu0 0.0
      %498 = vmatpush1.msra.mxu0 0.0
      %499 = vmatprep.subr.mxu0 0.0
      %500 = vmatpush1.msra.mxu0 0.0
      %501 = vmatprep.subr.mxu0 0.0
      %502 = vmatpush1.msra.mxu0 0.0
      %503 = vmatprep.subr.mxu0 0.0
      %504 = vmatpush1.msra.mxu0 0.0
      %505 = vmatprep.subr.mxu0 0.0
      %506 = vmatpush1.msra.mxu0 0.0
      %507 = vmatprep.subr.mxu0 0.0
      %508 = vmatpush1.msra.mxu0 0.0
      %509 = vmatprep.subr.mxu0 0.0
      %510 = vmatpush1.msra.mxu0 0.0
      %511 = vmatprep.subr.mxu0 0.0
      %512 = vmatpush1.msra.mxu0 0.0
      %513 = vmatprep.subr.mxu0 0.0
      %514 = vmatpush1.msra.mxu0 0.0
      %515 = vmatprep.subr.mxu0 0.0
      %516 = vmatpush1.msra.mxu0 0.0
      %517 = vmatprep.subr.mxu0 0.0
      %518 = vmatpush1.msra.mxu0 0.0
      %519 = vmatprep.subr.mxu0 0.0
      %520 = vmatpush1.msra.mxu0 0.0
      %521 = vmatprep.subr.mxu0 0.0
      %522 = vmatpush1.msra.mxu0 0.0
      %523 = vmatprep.subr.mxu0 0.0
      %524 = vmatpush1.msra.mxu0 0.0
      %525 = vmatprep.subr.mxu0 0.0
      %526 = vmatpush1.msra.mxu0 0.0
      %527 = vmatprep.subr.mxu0 0.0
      %528 = vmatpush1.msra.mxu0 0.0
      %529 = vmatprep.subr.mxu0 0.0
      %530 = vmatpush1.msra.mxu0 0.0
      %531 = vmatprep.subr.mxu0 0.0
      %532 = vmatpush1.msra.mxu0 0.0
      %533 = vmatprep.subr.mxu0 0.0
      %534 = vmatpush1.msra.mxu0 0.0
      %535 = vmatprep.subr.mxu0 0.0
      %536 = vmatpush1.msra.mxu0 0.0
      %537 = vmatprep.subr.mxu0 0.0
      %538 = vmatpush1.msra.mxu0 0.0
      %539 = vmatprep.subr.mxu0 0.0
      %540 = vmatpush1.msra.mxu0 0.0
      %541 = vmatprep.subr.mxu0 0.0
      %542 = vmatpush1.msra.mxu0 0.0
      %543 = vmatprep.subr.mxu0 0.0
      %544 = vmatpush1.msra.mxu0 0.0
      %545 = vmatprep.subr.mxu0 0.0
      %546 = vmatpush1.msra.mxu0 0.0
      %547 = vmatprep.subr.mxu0 0.0
      %548 = vmatpush1.msra.mxu0 0.0
      %549 = vmatprep.subr.mxu0 0.0
      %550 = vmatpush1.msra.mxu0 0.0
      %551 = vmatprep.subr.mxu0 0.0
      %552 = vmatpush1.msra.mxu0 0.0
      %553 = vmatprep.mubr.f32.mxu0 0.0
      %v554 = vand.u32 %v173, 4294901760
      %v555 = vsub.f32 %v173, %v554
      %v556 = vand.u32 %v555, 4294901760
      %557 = vmatmul.mubr.f32.gmra.mrb[0].mxu0 %v556
      %v558 = vpop.f32.mrb[0].mxu0
      %v559 = vadd.f32 %v463, %v558
      %v560 = vpop.f32.mrb[0].mxu0
      %561 = vmatprep.mubr.f32.mxu0 0.0
      %v562 = vand.u32 %v176, 4294901760
      %v563 = vsub.f32 %v176, %v562
      %v564 = vand.u32 %v563, 4294901760
      %565 = vmatmul.mubr.f32.gmra.mrb[0].mxu0 %v564
      %v566 = vpop.f32.mrb[0].mxu0
      %v567 = vadd.f32 %v470, %v566
      %v568 = vpop.f32.mrb[0].mxu0
      %569 = vmatprep.mubr.f32.mxu0 0.0
      %v570 = vand.u32 %v179, 4294901760
      %v571 = vsub.f32 %v179, %v570
      %v572 = vand.u32 %v571, 4294901760
      %573 = vmatmul.mubr.f32.gmra.mrb[0].mxu0 %v572
      %v574 = vpop.f32.mrb[0].mxu0
      %v575 = vadd.f32 %v477, %v574
      %v576 = vpop.f32.mrb[0].mxu0
      %577 = vmatprep.mubr.f32.mxu0 0.0
      %v578 = vand.u32 %v182, 4294901760
      %v579 = vsub.f32 %v182, %v578
      %v580 = vand.u32 %v579, 4294901760
      %581 = vmatmul.mubr.f32.gmra.mrb[0].mxu0 %v580
      %v582 = vpop.f32.mrb[0].mxu0
      %v583 = vadd.f32 %v484, %v582
      %v584 = vpop.f32.mrb[0].mxu0
      %585 = vdwg.mxu0
      %586 = vmatprep.subr.mxu0 0.0
      %v587 = vand.u32 %v158, 4294901760
      %v588 = vsub.f32 %v158, %v587
      %v589 = vand.u32 %v588, 4294901760
      %590 = vmatpush1.msra.mxu0 %v589
      %591 = vmatprep.subr.mxu0 0.0
      %v592 = vand.u32 %v159, 4294901760
      %v593 = vsub.f32 %v159, %v592
      %v594 = vand.u32 %v593, 4294901760
      %595 = vmatpush1.msra.mxu0 %v594
      %596 = vmatprep.subr.mxu0 0.0
      %597 = vmatpush1.msra.mxu0 0.0
      %598 = vmatprep.subr.mxu0 0.0
      %599 = vmatpush1.msra.mxu0 0.0
      %600 = vmatprep.subr.mxu0 0.0
      %601 = vmatpush1.msra.mxu0 0.0
      %602 = vmatprep.subr.mxu0 0.0
      %603 = vmatpush1.msra.mxu0 0.0
      %604 = vmatprep.subr.mxu0 0.0
      %605 = vmatpush1.msra.mxu0 0.0
      %606 = vmatprep.subr.mxu0 0.0
      %607 = vmatpush1.msra.mxu0 0.0
      %608 = vmatprep.subr.mxu0 0.0
      %609 = vmatpush1.msra.mxu0 0.0
      %610 = vmatprep.subr.mxu0 0.0
      %611 = vmatpush1.msra.mxu0 0.0
      %612 = vmatprep.subr.mxu0 0.0
      %613 = vmatpush1.msra.mxu0 0.0
      %614 = vmatprep.subr.mxu0 0.0
      %615 = vmatpush1.msra.mxu0 0.0
      %616 = vmatprep.subr.mxu0 0.0
      %617 = vmatpush1.msra.mxu0 0.0
      %618 = vmatprep.subr.mxu0 0.0
      %619 = vmatpush1.msra.mxu0 0.0
      %620 = vmatprep.subr.mxu0 0.0
      %621 = vmatpush1.msra.mxu0 0.0
      %622 = vmatprep.subr.mxu0 0.0
      %623 = vmatpush1.msra.mxu0 0.0
      %624 = vmatprep.subr.mxu0 0.0
      %625 = vmatpush1.msra.mxu0 0.0
      %626 = vmatprep.subr.mxu0 0.0
      %627 = vmatpush1.msra.mxu0 0.0
      %628 = vmatprep.subr.mxu0 0.0
      %629 = vmatpush1.msra.mxu0 0.0
      %630 = vmatprep.subr.mxu0 0.0
      %631 = vmatpush1.msra.mxu0 0.0
      %632 = vmatprep.subr.mxu0 0.0
      %633 = vmatpush1.msra.mxu0 0.0
      %634 = vmatprep.subr.mxu0 0.0
      %635 = vmatpush1.msra.mxu0 0.0
      %636 = vmatprep.subr.mxu0 0.0
      %637 = vmatpush1.msra.mxu0 0.0
      %638 = vmatprep.subr.mxu0 0.0
      %639 = vmatpush1.msra.mxu0 0.0
      %640 = vmatprep.subr.mxu0 0.0
      %641 = vmatpush1.msra.mxu0 0.0
      %642 = vmatprep.subr.mxu0 0.0
      %643 = vmatpush1.msra.mxu0 0.0
      %644 = vmatprep.subr.mxu0 0.0
      %645 = vmatpush1.msra.mxu0 0.0
      %646 = vmatprep.subr.mxu0 0.0
      %647 = vmatpush1.msra.mxu0 0.0
      %648 = vmatprep.subr.mxu0 0.0
      %649 = vmatpush1.msra.mxu0 0.0
      %650 = vmatprep.subr.mxu0 0.0
      %651 = vmatpush1.msra.mxu0 0.0
      %652 = vmatprep.subr.mxu0 0.0
      %653 = vmatpush1.msra.mxu0 0.0
      %654 = vmatprep.subr.mxu0 0.0
      %655 = vmatpush1.msra.mxu0 0.0
      %656 = vmatprep.mubr.f32.mxu0 0.0
      %v657 = vand.u32 %v173, 4294901760
      %658 = vmatmul.mubr.f32.gmra.mrb[0].mxu0 %v657
      %v659 = vpop.f32.mrb[0].mxu0
      %v660 = vadd.f32 %v559, %v659
      %v661 = vpop.f32.mrb[0].mxu0
      %662 = vmatprep.mubr.f32.mxu0 0.0
      %v663 = vand.u32 %v176, 4294901760
      %664 = vmatmul.mubr.f32.gmra.mrb[0].mxu0 %v663
      %v665 = vpop.f32.mrb[0].mxu0
      %v666 = vadd.f32 %v567, %v665
      %v667 = vpop.f32.mrb[0].mxu0
      %668 = vmatprep.mubr.f32.mxu0 0.0
      %v669 = vand.u32 %v179, 4294901760
      %670 = vmatmul.mubr.f32.gmra.mrb[0].mxu0 %v669
      %v671 = vpop.f32.mrb[0].mxu0
      %v672 = vadd.f32 %v575, %v671
      %v673 = vpop.f32.mrb[0].mxu0
      %674 = vmatprep.mubr.f32.mxu0 0.0
      %v675 = vand.u32 %v182, 4294901760
      %676 = vmatmul.mubr.f32.gmra.mrb[0].mxu0 %v675
      %v677 = vpop.f32.mrb[0].mxu0
      %v678 = vadd.f32 %v583, %v677
      %v679 = vpop.f32.mrb[0].mxu0
      %680 = vdwg.mxu0
      %681 = vmatprep.subr.mxu0 0.0
      %v682 = vand.u32 %v158, 4294901760
      %683 = vmatpush1.msra.mxu0 %v682
      %684 = vmatprep.subr.mxu0 0.0
      %v685 = vand.u32 %v159, 4294901760
      %686 = vmatpush1.msra.mxu0 %v685
      %687 = vmatprep.subr.mxu0 0.0
      %688 = vmatpush1.msra.mxu0 0.0
      %689 = vmatprep.subr.mxu0 0.0
      %690 = vmatpush1.msra.mxu0 0.0
      %691 = vmatprep.subr.mxu0 0.0
      %692 = vmatpush1.msra.mxu0 0.0
      %693 = vmatprep.subr.mxu0 0.0
      %694 = vmatpush1.msra.mxu0 0.0
      %695 = vmatprep.subr.mxu0 0.0
      %696 = vmatpush1.msra.mxu0 0.0
      %697 = vmatprep.subr.mxu0 0.0
      %698 = vmatpush1.msra.mxu0 0.0
      %699 = vmatprep.subr.mxu0 0.0
      %700 = vmatpush1.msra.mxu0 0.0
      %701 = vmatprep.subr.mxu0 0.0
      %702 = vmatpush1.msra.mxu0 0.0
      %703 = vmatprep.subr.mxu0 0.0
      %704 = vmatpush1.msra.mxu0 0.0
      %705 = vmatprep.subr.mxu0 0.0
      %706 = vmatpush1.msra.mxu0 0.0
      %707 = vmatprep.subr.mxu0 0.0
      %708 = vmatpush1.msra.mxu0 0.0
      %709 = vmatprep.subr.mxu0 0.0
      %710 = vmatpush1.msra.mxu0 0.0
      %711 = vmatprep.subr.mxu0 0.0
      %712 = vmatpush1.msra.mxu0 0.0
      %713 = vmatprep.subr.mxu0 0.0
      %714 = vmatpush1.msra.mxu0 0.0
      %715 = vmatprep.subr.mxu0 0.0
      %716 = vmatpush1.msra.mxu0 0.0
      %717 = vmatprep.subr.mxu0 0.0
      %718 = vmatpush1.msra.mxu0 0.0
      %719 = vmatprep.subr.mxu0 0.0
      %720 = vmatpush1.msra.mxu0 0.0
      %721 = vmatprep.subr.mxu0 0.0
      %722 = vmatpush1.msra.mxu0 0.0
      %723 = vmatprep.subr.mxu0 0.0
      %724 = vmatpush1.msra.mxu0 0.0
      %725 = vmatprep.subr.mxu0 0.0
      %726 = vmatpush1.msra.mxu0 0.0
      %727 = vmatprep.subr.mxu0 0.0
      %728 = vmatpush1.msra.mxu0 0.0
      %729 = vmatprep.subr.mxu0 0.0
      %730 = vmatpush1.msra.mxu0 0.0
      %731 = vmatprep.subr.mxu0 0.0
      %732 = vmatpush1.msra.mxu0 0.0
      %733 = vmatprep.subr.mxu0 0.0
      %734 = vmatpush1.msra.mxu0 0.0
      %735 = vmatprep.subr.mxu0 0.0
      %736 = vmatpush1.msra.mxu0 0.0
      %737 = vmatprep.subr.mxu0 0.0
      %738 = vmatpush1.msra.mxu0 0.0
      %739 = vmatprep.subr.mxu0 0.0
      %740 = vmatpush1.msra.mxu0 0.0
      %741 = vmatprep.subr.mxu0 0.0
      %742 = vmatpush1.msra.mxu0 0.0
      %743 = vmatprep.subr.mxu0 0.0
      %744 = vmatpush1.msra.mxu0 0.0
      %745 = vmatprep.subr.mxu0 0.0
      %746 = vmatpush1.msra.mxu0 0.0
      %747 = vmatprep.mubr.f32.mxu0 0.0
      %v748 = vand.u32 %v173, 4294901760
      %749 = vmatmul.mubr.f32.gmra.mrb[0].mxu0 %v748
      %v750 = vpop.f32.mrb[0].mxu0
      %v751 = vadd.f32 %v660, %v750
      %v752 = vpop.f32.mrb[0].mxu0
      %753 = vmatprep.mubr.f32.mxu0 0.0
      %v754 = vand.u32 %v176, 4294901760
      %755 = vmatmul.mubr.f32.gmra.mrb[0].mxu0 %v754
      %v756 = vpop.f32.mrb[0].mxu0
      %v757 = vadd.f32 %v666, %v756
      %v758 = vpop.f32.mrb[0].mxu0
      %759 = vmatprep.mubr.f32.mxu0 0.0
      %v760 = vand.u32 %v179, 4294901760
      %761 = vmatmul.mubr.f32.gmra.mrb[0].mxu0 %v760
      %v762 = vpop.f32.mrb[0].mxu0
      %v763 = vadd.f32 %v672, %v762
      %v764 = vpop.f32.mrb[0].mxu0
      %765 = vmatprep.mubr.f32.mxu0 0.0
      %v766 = vand.u32 %v182, 4294901760
      %767 = vmatmul.mubr.f32.gmra.mrb[0].mxu0 %v766
      %v768 = vpop.f32.mrb[0].mxu0
      %v769 = vadd.f32 %v678, %v768
      %v770 = vpop.f32.mrb[0].mxu0
      %771 = vdwg.mxu0
      %vm772 = vcmask 64512
      %773 = vst.msk [vmem:[%s147] sm:$0xff] %vm772, %v751
      %774 = vst.msk [vmem:[%s147 + $0x8] sm:$0xff] %vm772, %v757
      %775 = vst.msk [vmem:[%s147 + $0x10] sm:$0xff] %vm772, %v763
      %776 = vst.msk [vmem:[%s147 + $0x18] sm:$0xff] %vm772, %v769
      %777 = vmatprep.subr.mxu0 0.0
      %v778 = vand.u32 %v165, 4294901760
      %779 = vmatpush1.msra.mxu0 %v778
      %780 = vmatprep.subr.mxu0 0.0
      %v781 = vand.u32 %v166, 4294901760
      %782 = vmatpush1.msra.mxu0 %v781
      %783 = vmatprep.subr.mxu0 0.0
      %784 = vmatpush1.msra.mxu0 0.0
      %785 = vmatprep.subr.mxu0 0.0
      %786 = vmatpush1.msra.mxu0 0.0
      %787 = vmatprep.subr.mxu0 0.0
      %788 = vmatpush1.msra.mxu0 0.0
      %789 = vmatprep.subr.mxu0 0.0
      %790 = vmatpush1.msra.mxu0 0.0
      %791 = vmatprep.subr.mxu0 0.0
      %792 = vmatpush1.msra.mxu0 0.0
      %793 = vmatprep.subr.mxu0 0.0
      %794 = vmatpush1.msra.mxu0 0.0
      %795 = vmatprep.subr.mxu0 0.0
      %796 = vmatpush1.msra.mxu0 0.0
      %797 = vmatprep.subr.mxu0 0.0
      %798 = vmatpush1.msra.mxu0 0.0
      %799 = vmatprep.subr.mxu0 0.0
      %800 = vmatpush1.msra.mxu0 0.0
      %801 = vmatprep.subr.mxu0 0.0
      %802 = vmatpush1.msra.mxu0 0.0
      %803 = vmatprep.subr.mxu0 0.0
      %804 = vmatpush1.msra.mxu0 0.0
      %805 = vmatprep.subr.mxu0 0.0
      %806 = vmatpush1.msra.mxu0 0.0
      %807 = vmatprep.subr.mxu0 0.0
      %808 = vmatpush1.msra.mxu0 0.0
      %809 = vmatprep.subr.mxu0 0.0
      %810 = vmatpush1.msra.mxu0 0.0
      %811 = vmatprep.subr.mxu0 0.0
      %812 = vmatpush1.msra.mxu0 0.0
      %813 = vmatprep.subr.mxu0 0.0
      %814 = vmatpush1.msra.mxu0 0.0
      %815 = vmatprep.subr.mxu0 0.0
      %816 = vmatpush1.msra.mxu0 0.0
      %817 = vmatprep.subr.mxu0 0.0
      %818 = vmatpush1.msra.mxu0 0.0
      %819 = vmatprep.subr.mxu0 0.0
      %820 = vmatpush1.msra.mxu0 0.0
      %821 = vmatprep.subr.mxu0 0.0
      %822 = vmatpush1.msra.mxu0 0.0
      %823 = vmatprep.subr.mxu0 0.0
      %824 = vmatpush1.msra.mxu0 0.0
      %825 = vmatprep.subr.mxu0 0.0
      %826 = vmatpush1.msra.mxu0 0.0
      %827 = vmatprep.subr.mxu0 0.0
      %828 = vmatpush1.msra.mxu0 0.0
      %829 = vmatprep.subr.mxu0 0.0
      %830 = vmatpush1.msra.mxu0 0.0
      %831 = vmatprep.subr.mxu0 0.0
      %832 = vmatpush1.msra.mxu0 0.0
      %833 = vmatprep.subr.mxu0 0.0
      %834 = vmatpush1.msra.mxu0 0.0
      %835 = vmatprep.subr.mxu0 0.0
      %836 = vmatpush1.msra.mxu0 0.0
      %837 = vmatprep.subr.mxu0 0.0
      %838 = vmatpush1.msra.mxu0 0.0
      %839 = vmatprep.subr.mxu0 0.0
      %840 = vmatpush1.msra.mxu0 0.0
      %841 = vmatprep.subr.mxu0 0.0
      %842 = vmatpush1.msra.mxu0 0.0
      %843 = vmatprep.mubr.f32.mxu0 0.0
      %v844 = vand.u32 %v173, 4294901760
      %v845 = vsub.f32 %v173, %v844
      %v846 = vand.u32 %v845, 4294901760
      %v847 = vsub.f32 %v845, %v846
      %v848 = vand.u32 %v847, 4294901760
      %849 = vmatmul.mubr.f32.gmra.mrb[0].mxu0 %v848
      %v850 = vpop.f32.mrb[0].mxu0
      %v851 = vadd.f32 0.0, %v850
      %v852 = vpop.f32.mrb[0].mxu0
      %853 = vmatprep.mubr.f32.mxu0 0.0
      %v854 = vand.u32 %v176, 4294901760
      %v855 = vsub.f32 %v176, %v854
      %v856 = vand.u32 %v855, 4294901760
      %v857 = vsub.f32 %v855, %v856
      %v858 = vand.u32 %v857, 4294901760
      %859 = vmatmul.mubr.f32.gmra.mrb[0].mxu0 %v858
      %v860 = vpop.f32.mrb[0].mxu0
      %v861 = vadd.f32 0.0, %v860
      %v862 = vpop.f32.mrb[0].mxu0
      %863 = vmatprep.mubr.f32.mxu0 0.0
      %v864 = vand.u32 %v179, 4294901760
      %v865 = vsub.f32 %v179, %v864
      %v866 = vand.u32 %v865, 4294901760
      %v867 = vsub.f32 %v865, %v866
      %v868 = vand.u32 %v867, 4294901760
      %869 = vmatmul.mubr.f32.gmra.mrb[0].mxu0 %v868
      %v870 = vpop.f32.mrb[0].mxu0
      %v871 = vadd.f32 0.0, %v870
      %v872 = vpop.f32.mrb[0].mxu0
      %873 = vmatprep.mubr.f32.mxu0 0.0
      %v874 = vand.u32 %v182, 4294901760
      %v875 = vsub.f32 %v182, %v874
      %v876 = vand.u32 %v875, 4294901760
      %v877 = vsub.f32 %v875, %v876
      %v878 = vand.u32 %v877, 4294901760
      %879 = vmatmul.mubr.f32.gmra.mrb[0].mxu0 %v878
      %v880 = vpop.f32.mrb[0].mxu0
      %v881 = vadd.f32 0.0, %v880
      %v882 = vpop.f32.mrb[0].mxu0
      %883 = vdwg.mxu0
      %884 = vmatprep.subr.mxu0 0.0
      %v885 = vand.u32 %v165, 4294901760
      %v886 = vsub.f32 %v165, %v885
      %v887 = vand.u32 %v886, 4294901760
      %v888 = vsub.f32 %v886, %v887
      %v889 = vand.u32 %v888, 4294901760
      %890 = vmatpush1.msra.mxu0 %v889
      %891 = vmatprep.subr.mxu0 0.0
      %v892 = vand.u32 %v166, 4294901760
      %v893 = vsub.f32 %v166, %v892
      %v894 = vand.u32 %v893, 4294901760
      %v895 = vsub.f32 %v893, %v894
      %v896 = vand.u32 %v895, 4294901760
      %897 = vmatpush1.msra.mxu0 %v896
      %898 = vmatprep.subr.mxu0 0.0
      %899 = vmatpush1.msra.mxu0 0.0
      %900 = vmatprep.subr.mxu0 0.0
      %901 = vmatpush1.msra.mxu0 0.0
      %902 = vmatprep.subr.mxu0 0.0
      %903 = vmatpush1.msra.mxu0 0.0
      %904 = vmatprep.subr.mxu0 0.0
      %905 = vmatpush1.msra.mxu0 0.0
      %906 = vmatprep.subr.mxu0 0.0
      %907 = vmatpush1.msra.mxu0 0.0
      %908 = vmatprep.subr.mxu0 0.0
      %909 = vmatpush1.msra.mxu0 0.0
      %910 = vmatprep.subr.mxu0 0.0
      %911 = vmatpush1.msra.mxu0 0.0
      %912 = vmatprep.subr.mxu0 0.0
      %913 = vmatpush1.msra.mxu0 0.0
      %914 = vmatprep.subr.mxu0 0.0
      %915 = vmatpush1.msra.mxu0 0.0
      %916 = vmatprep.subr.mxu0 0.0
      %917 = vmatpush1.msra.mxu0 0.0
      %918 = vmatprep.subr.mxu0 0.0
      %919 = vmatpush1.msra.mxu0 0.0
      %920 = vmatprep.subr.mxu0 0.0
      %921 = vmatpush1.msra.mxu0 0.0
      %922 = vmatprep.subr.mxu0 0.0
      %923 = vmatpush1.msra.mxu0 0.0
      %924 = vmatprep.subr.mxu0 0.0
      %925 = vmatpush1.msra.mxu0 0.0
      %926 = vmatprep.subr.mxu0 0.0
      %927 = vmatpush1.msra.mxu0 0.0
      %928 = vmatprep.subr.mxu0 0.0
      %929 = vmatpush1.msra.mxu0 0.0
      %930 = vmatprep.subr.mxu0 0.0
      %931 = vmatpush1.msra.mxu0 0.0
      %932 = vmatprep.subr.mxu0 0.0
      %933 = vmatpush1.msra.mxu0 0.0
      %934 = vmatprep.subr.mxu0 0.0
      %935 = vmatpush1.msra.mxu0 0.0
      %936 = vmatprep.subr.mxu0 0.0
      %937 = vmatpush1.msra.mxu0 0.0
      %938 = vmatprep.subr.mxu0 0.0
      %939 = vmatpush1.msra.mxu0 0.0
      %940 = vmatprep.subr.mxu0 0.0
      %941 = vmatpush1.msra.mxu0 0.0
      %942 = vmatprep.subr.mxu0 0.0
      %943 = vmatpush1.msra.mxu0 0.0
      %944 = vmatprep.subr.mxu0 0.0
      %945 = vmatpush1.msra.mxu0 0.0
      %946 = vmatprep.subr.mxu0 0.0
      %947 = vmatpush1.msra.mxu0 0.0
      %948 = vmatprep.subr.mxu0 0.0
      %949 = vmatpush1.msra.mxu0 0.0
      %950 = vmatprep.subr.mxu0 0.0
      %951 = vmatpush1.msra.mxu0 0.0
      %952 = vmatprep.subr.mxu0 0.0
      %953 = vmatpush1.msra.mxu0 0.0
      %954 = vmatprep.subr.mxu0 0.0
      %955 = vmatpush1.msra.mxu0 0.0
      %956 = vmatprep.subr.mxu0 0.0
      %957 = vmatpush1.msra.mxu0 0.0
      %958 = vmatprep.mubr.f32.mxu0 0.0
      %v959 = vand.u32 %v173, 4294901760
      %960 = vmatmul.mubr.f32.gmra.mrb[0].mxu0 %v959
      %v961 = vpop.f32.mrb[0].mxu0
      %v962 = vadd.f32 %v851, %v961
      %v963 = vpop.f32.mrb[0].mxu0
      %964 = vmatprep.mubr.f32.mxu0 0.0
      %v965 = vand.u32 %v176, 4294901760
      %966 = vmatmul.mubr.f32.gmra.mrb[0].mxu0 %v965
      %v967 = vpop.f32.mrb[0].mxu0
      %v968 = vadd.f32 %v861, %v967
      %v969 = vpop.f32.mrb[0].mxu0
      %970 = vmatprep.mubr.f32.mxu0 0.0
      %v971 = vand.u32 %v179, 4294901760
      %972 = vmatmul.mubr.f32.gmra.mrb[0].mxu0 %v971
      %v973 = vpop.f32.mrb[0].mxu0
      %v974 = vadd.f32 %v871, %v973
      %v975 = vpop.f32.mrb[0].mxu0
      %976 = vmatprep.mubr.f32.mxu0 0.0
      %v977 = vand.u32 %v182, 4294901760
      %978 = vmatmul.mubr.f32.gmra.mrb[0].mxu0 %v977
      %v979 = vpop.f32.mrb[0].mxu0
      %v980 = vadd.f32 %v881, %v979
      %v981 = vpop.f32.mrb[0].mxu0
      %982 = vdwg.mxu0
      %983 = vmatprep.subr.mxu0 0.0
      %v984 = vand.u32 %v165, 4294901760
      %v985 = vsub.f32 %v165, %v984
      %986 = vmatpush1.msra.mxu0 %v985
      %987 = vmatprep.subr.mxu0 0.0
      %v988 = vand.u32 %v166, 4294901760
      %v989 = vsub.f32 %v166, %v988
      %990 = vmatpush1.msra.mxu0 %v989
      %991 = vmatprep.subr.mxu0 0.0
      %992 = vmatpush1.msra.mxu0 0.0
      %993 = vmatprep.subr.mxu0 0.0
      %994 = vmatpush1.msra.mxu0 0.0
      %995 = vmatprep.subr.mxu0 0.0
      %996 = vmatpush1.msra.mxu0 0.0
      %997 = vmatprep.subr.mxu0 0.0
      %998 = vmatpush1.msra.mxu0 0.0
      %999 = vmatprep.subr.mxu0 0.0
      %1000 = vmatpush1.msra.mxu0 0.0
      %1001 = vmatprep.subr.mxu0 0.0
      %1002 = vmatpush1.msra.mxu0 0.0
      %1003 = vmatprep.subr.mxu0 0.0
      %1004 = vmatpush1.msra.mxu0 0.0
      %1005 = vmatprep.subr.mxu0 0.0
      %1006 = vmatpush1.msra.mxu0 0.0
      %1007 = vmatprep.subr.mxu0 0.0
      %1008 = vmatpush1.msra.mxu0 0.0
      %1009 = vmatprep.subr.mxu0 0.0
      %1010 = vmatpush1.msra.mxu0 0.0
      %1011 = vmatprep.subr.mxu0 0.0
      %1012 = vmatpush1.msra.mxu0 0.0
      %1013 = vmatprep.subr.mxu0 0.0
      %1014 = vmatpush1.msra.mxu0 0.0
      %1015 = vmatprep.subr.mxu0 0.0
      %1016 = vmatpush1.msra.mxu0 0.0
      %1017 = vmatprep.subr.mxu0 0.0
      %1018 = vmatpush1.msra.mxu0 0.0
      %1019 = vmatprep.subr.mxu0 0.0
      %1020 = vmatpush1.msra.mxu0 0.0
      %1021 = vmatprep.subr.mxu0 0.0
      %1022 = vmatpush1.msra.mxu0 0.0
      %1023 = vmatprep.subr.mxu0 0.0
      %1024 = vmatpush1.msra.mxu0 0.0
      %1025 = vmatprep.subr.mxu0 0.0
      %1026 = vmatpush1.msra.mxu0 0.0
      %1027 = vmatprep.subr.mxu0 0.0
      %1028 = vmatpush1.msra.mxu0 0.0
      %1029 = vmatprep.subr.mxu0 0.0
      %1030 = vmatpush1.msra.mxu0 0.0
      %1031 = vmatprep.subr.mxu0 0.0
      %1032 = vmatpush1.msra.mxu0 0.0
      %1033 = vmatprep.subr.mxu0 0.0
      %1034 = vmatpush1.msra.mxu0 0.0
      %1035 = vmatprep.subr.mxu0 0.0
      %1036 = vmatpush1.msra.mxu0 0.0
      %1037 = vmatprep.subr.mxu0 0.0
      %1038 = vmatpush1.msra.mxu0 0.0
      %1039 = vmatprep.subr.mxu0 0.0
      %1040 = vmatpush1.msra.mxu0 0.0
      %1041 = vmatprep.subr.mxu0 0.0
      %1042 = vmatpush1.msra.mxu0 0.0
      %1043 = vmatprep.subr.mxu0 0.0
      %1044 = vmatpush1.msra.mxu0 0.0
      %1045 = vmatprep.subr.mxu0 0.0
      %1046 = vmatpush1.msra.mxu0 0.0
      %1047 = vmatprep.subr.mxu0 0.0
      %1048 = vmatpush1.msra.mxu0 0.0
      %1049 = vmatprep.subr.mxu0 0.0
      %1050 = vmatpush1.msra.mxu0 0.0
      %1051 = vmatprep.mubr.f32.mxu0 0.0
      %v1052 = vand.u32 %v173, 4294901760
      %v1053 = vsub.f32 %v173, %v1052
      %1054 = vmatmul.mubr.f32.gmra.mrb[0].mxu0 %v1053
      %v1055 = vpop.f32.mrb[0].mxu0
      %v1056 = vadd.f32 %v962, %v1055
      %v1057 = vpop.f32.mrb[0].mxu0
      %1058 = vmatprep.mubr.f32.mxu0 0.0
      %v1059 = vand.u32 %v176, 4294901760
      %v1060 = vsub.f32 %v176, %v1059
      %1061 = vmatmul.mubr.f32.gmra.mrb[0].mxu0 %v1060
      %v1062 = vpop.f32.mrb[0].mxu0
      %v1063 = vadd.f32 %v968, %v1062
      %v1064 = vpop.f32.mrb[0].mxu0
      %1065 = vmatprep.mubr.f32.mxu0 0.0
      %v1066 = vand.u32 %v179, 4294901760
      %v1067 = vsub.f32 %v179, %v1066
      %1068 = vmatmul.mubr.f32.gmra.mrb[0].mxu0 %v1067
      %v1069 = vpop.f32.mrb[0].mxu0
      %v1070 = vadd.f32 %v974, %v1069
      %v1071 = vpop.f32.mrb[0].mxu0
      %1072 = vmatprep.mubr.f32.mxu0 0.0
      %v1073 = vand.u32 %v182, 4294901760
      %v1074 = vsub.f32 %v182, %v1073
      %1075 = vmatmul.mubr.f32.gmra.mrb[0].mxu0 %v1074
      %v1076 = vpop.f32.mrb[0].mxu0
      %v1077 = vadd.f32 %v980, %v1076
      %v1078 = vpop.f32.mrb[0].mxu0
      %1079 = vdwg.mxu0
      %1080 = vmatprep.subr.mxu0 0.0
      %v1081 = vand.u32 %v165, 4294901760
      %1082 = vmatpush1.msra.mxu0 %v1081
      %1083 = vmatprep.subr.mxu0 0.0
      %v1084 = vand.u32 %v166, 4294901760
      %1085 = vmatpush1.msra.mxu0 %v1084
      %1086 = vmatprep.subr.mxu0 0.0
      %1087 = vmatpush1.msra.mxu0 0.0
      %1088 = vmatprep.subr.mxu0 0.0
      %1089 = vmatpush1.msra.mxu0 0.0
      %1090 = vmatprep.subr.mxu0 0.0
      %1091 = vmatpush1.msra.mxu0 0.0
      %1092 = vmatprep.subr.mxu0 0.0
      %1093 = vmatpush1.msra.mxu0 0.0
      %1094 = vmatprep.subr.mxu0 0.0
      %1095 = vmatpush1.msra.mxu0 0.0
      %1096 = vmatprep.subr.mxu0 0.0
      %1097 = vmatpush1.msra.mxu0 0.0
      %1098 = vmatprep.subr.mxu0 0.0
      %1099 = vmatpush1.msra.mxu0 0.0
      %1100 = vmatprep.subr.mxu0 0.0
      %1101 = vmatpush1.msra.mxu0 0.0
      %1102 = vmatprep.subr.mxu0 0.0
      %1103 = vmatpush1.msra.mxu0 0.0
      %1104 = vmatprep.subr.mxu0 0.0
      %1105 = vmatpush1.msra.mxu0 0.0
      %1106 = vmatprep.subr.mxu0 0.0
      %1107 = vmatpush1.msra.mxu0 0.0
      %1108 = vmatprep.subr.mxu0 0.0
      %1109 = vmatpush1.msra.mxu0 0.0
      %1110 = vmatprep.subr.mxu0 0.0
      %1111 = vmatpush1.msra.mxu0 0.0
      %1112 = vmatprep.subr.mxu0 0.0
      %1113 = vmatpush1.msra.mxu0 0.0
      %1114 = vmatprep.subr.mxu0 0.0
      %1115 = vmatpush1.msra.mxu0 0.0
      %1116 = vmatprep.subr.mxu0 0.0
      %1117 = vmatpush1.msra.mxu0 0.0
      %1118 = vmatprep.subr.mxu0 0.0
      %1119 = vmatpush1.msra.mxu0 0.0
      %1120 = vmatprep.subr.mxu0 0.0
      %1121 = vmatpush1.msra.mxu0 0.0
      %1122 = vmatprep.subr.mxu0 0.0
      %1123 = vmatpush1.msra.mxu0 0.0
      %1124 = vmatprep.subr.mxu0 0.0
      %1125 = vmatpush1.msra.mxu0 0.0
      %1126 = vmatprep.subr.mxu0 0.0
      %1127 = vmatpush1.msra.mxu0 0.0
      %1128 = vmatprep.subr.mxu0 0.0
      %1129 = vmatpush1.msra.mxu0 0.0
      %1130 = vmatprep.subr.mxu0 0.0
      %1131 = vmatpush1.msra.mxu0 0.0
      %1132 = vmatprep.subr.mxu0 0.0
      %1133 = vmatpush1.msra.mxu0 0.0
      %1134 = vmatprep.subr.mxu0 0.0
      %1135 = vmatpush1.msra.mxu0 0.0
      %1136 = vmatprep.subr.mxu0 0.0
      %1137 = vmatpush1.msra.mxu0 0.0
      %1138 = vmatprep.subr.mxu0 0.0
      %1139 = vmatpush1.msra.mxu0 0.0
      %1140 = vmatprep.subr.mxu0 0.0
      %1141 = vmatpush1.msra.mxu0 0.0
      %1142 = vmatprep.subr.mxu0 0.0
      %1143 = vmatpush1.msra.mxu0 0.0
      %1144 = vmatprep.subr.mxu0 0.0
      %1145 = vmatpush1.msra.mxu0 0.0
      %1146 = vmatprep.mubr.f32.mxu0 0.0
      %v1147 = vand.u32 %v173, 4294901760
      %v1148 = vsub.f32 %v173, %v1147
      %v1149 = vand.u32 %v1148, 4294901760
      %1150 = vmatmul.mubr.f32.gmra.mrb[0].mxu0 %v1149
      %v1151 = vpop.f32.mrb[0].mxu0
      %v1152 = vadd.f32 %v1056, %v1151
      %v1153 = vpop.f32.mrb[0].mxu0
      %1154 = vmatprep.mubr.f32.mxu0 0.0
      %v1155 = vand.u32 %v176, 4294901760
      %v1156 = vsub.f32 %v176, %v1155
      %v1157 = vand.u32 %v1156, 4294901760
      %1158 = vmatmul.mubr.f32.gmra.mrb[0].mxu0 %v1157
      %v1159 = vpop.f32.mrb[0].mxu0
      %v1160 = vadd.f32 %v1063, %v1159
      %v1161 = vpop.f32.mrb[0].mxu0
      %1162 = vmatprep.mubr.f32.mxu0 0.0
      %v1163 = vand.u32 %v179, 4294901760
      %v1164 = vsub.f32 %v179, %v1163
      %v1165 = vand.u32 %v1164, 4294901760
      %1166 = vmatmul.mubr.f32.gmra.mrb[0].mxu0 %v1165
      %v1167 = vpop.f32.mrb[0].mxu0
      %v1168 = vadd.f32 %v1070, %v1167
      %v1169 = vpop.f32.mrb[0].mxu0
      %1170 = vmatprep.mubr.f32.mxu0 0.0
      %v1171 = vand.u32 %v182, 4294901760
      %v1172 = vsub.f32 %v182, %v1171
      %v1173 = vand.u32 %v1172, 4294901760
      %1174 = vmatmul.mubr.f32.gmra.mrb[0].mxu0 %v1173
      %v1175 = vpop.f32.mrb[0].mxu0
      %v1176 = vadd.f32 %v1077, %v1175
      %v1177 = vpop.f32.mrb[0].mxu0
      %1178 = vdwg.mxu0
      %1179 = vmatprep.subr.mxu0 0.0
      %v1180 = vand.u32 %v165, 4294901760
      %v1181 = vsub.f32 %v165, %v1180
      %v1182 = vand.u32 %v1181, 4294901760
      %1183 = vmatpush1.msra.mxu0 %v1182
      %1184 = vmatprep.subr.mxu0 0.0
      %v1185 = vand.u32 %v166, 4294901760
      %v1186 = vsub.f32 %v166, %v1185
      %v1187 = vand.u32 %v1186, 4294901760
      %1188 = vmatpush1.msra.mxu0 %v1187
      %1189 = vmatprep.subr.mxu0 0.0
      %1190 = vmatpush1.msra.mxu0 0.0
      %1191 = vmatprep.subr.mxu0 0.0
      %1192 = vmatpush1.msra.mxu0 0.0
      %1193 = vmatprep.subr.mxu0 0.0
      %1194 = vmatpush1.msra.mxu0 0.0
      %1195 = vmatprep.subr.mxu0 0.0
      %1196 = vmatpush1.msra.mxu0 0.0
      %1197 = vmatprep.subr.mxu0 0.0
      %1198 = vmatpush1.msra.mxu0 0.0
      %1199 = vmatprep.subr.mxu0 0.0
      %1200 = vmatpush1.msra.mxu0 0.0
      %1201 = vmatprep.subr.mxu0 0.0
      %1202 = vmatpush1.msra.mxu0 0.0
      %1203 = vmatprep.subr.mxu0 0.0
      %1204 = vmatpush1.msra.mxu0 0.0
      %1205 = vmatprep.subr.mxu0 0.0
      %1206 = vmatpush1.msra.mxu0 0.0
      %1207 = vmatprep.subr.mxu0 0.0
      %1208 = vmatpush1.msra.mxu0 0.0
      %1209 = vmatprep.subr.mxu0 0.0
      %1210 = vmatpush1.msra.mxu0 0.0
      %1211 = vmatprep.subr.mxu0 0.0
      %1212 = vmatpush1.msra.mxu0 0.0
      %1213 = vmatprep.subr.mxu0 0.0
      %1214 = vmatpush1.msra.mxu0 0.0
      %1215 = vmatprep.subr.mxu0 0.0
      %1216 = vmatpush1.msra.mxu0 0.0
      %1217 = vmatprep.subr.mxu0 0.0
      %1218 = vmatpush1.msra.mxu0 0.0
      %1219 = vmatprep.subr.mxu0 0.0
      %1220 = vmatpush1.msra.mxu0 0.0
      %1221 = vmatprep.subr.mxu0 0.0
      %1222 = vmatpush1.msra.mxu0 0.0
      %1223 = vmatprep.subr.mxu0 0.0
      %1224 = vmatpush1.msra.mxu0 0.0
      %1225 = vmatprep.subr.mxu0 0.0
      %1226 = vmatpush1.msra.mxu0 0.0
      %1227 = vmatprep.subr.mxu0 0.0
      %1228 = vmatpush1.msra.mxu0 0.0
      %1229 = vmatprep.subr.mxu0 0.0
      %1230 = vmatpush1.msra.mxu0 0.0
      %1231 = vmatprep.subr.mxu0 0.0
      %1232 = vmatpush1.msra.mxu0 0.0
      %1233 = vmatprep.subr.mxu0 0.0
      %1234 = vmatpush1.msra.mxu0 0.0
      %1235 = vmatprep.subr.mxu0 0.0
      %1236 = vmatpush1.msra.mxu0 0.0
      %1237 = vmatprep.subr.mxu0 0.0
      %1238 = vmatpush1.msra.mxu0 0.0
      %1239 = vmatprep.subr.mxu0 0.0
      %1240 = vmatpush1.msra.mxu0 0.0
      %1241 = vmatprep.subr.mxu0 0.0
      %1242 = vmatpush1.msra.mxu0 0.0
      %1243 = vmatprep.subr.mxu0 0.0
      %1244 = vmatpush1.msra.mxu0 0.0
      %1245 = vmatprep.subr.mxu0 0.0
      %1246 = vmatpush1.msra.mxu0 0.0
      %1247 = vmatprep.subr.mxu0 0.0
      %1248 = vmatpush1.msra.mxu0 0.0
      %1249 = vmatprep.mubr.f32.mxu0 0.0
      %v1250 = vand.u32 %v173, 4294901760
      %1251 = vmatmul.mubr.f32.gmra.mrb[0].mxu0 %v1250
      %v1252 = vpop.f32.mrb[0].mxu0
      %v1253 = vadd.f32 %v1152, %v1252
      %v1254 = vpop.f32.mrb[0].mxu0
      %1255 = vmatprep.mubr.f32.mxu0 0.0
      %v1256 = vand.u32 %v176, 4294901760
      %1257 = vmatmul.mubr.f32.gmra.mrb[0].mxu0 %v1256
      %v1258 = vpop.f32.mrb[0].mxu0
      %v1259 = vadd.f32 %v1160, %v1258
      %v1260 = vpop.f32.mrb[0].mxu0
      %1261 = vmatprep.mubr.f32.mxu0 0.0
      %v1262 = vand.u32 %v179, 4294901760
      %1263 = vmatmul.mubr.f32.gmra.mrb[0].mxu0 %v1262
      %v1264 = vpop.f32.mrb[0].mxu0
      %v1265 = vadd.f32 %v1168, %v1264
      %v1266 = vpop.f32.mrb[0].mxu0
      %1267 = vmatprep.mubr.f32.mxu0 0.0
      %v1268 = vand.u32 %v182, 4294901760
      %1269 = vmatmul.mubr.f32.gmra.mrb[0].mxu0 %v1268
      %v1270 = vpop.f32.mrb[0].mxu0
      %v1271 = vadd.f32 %v1176, %v1270
      %v1272 = vpop.f32.mrb[0].mxu0
      %1273 = vdwg.mxu0
      %1274 = vmatprep.subr.mxu0 0.0
      %v1275 = vand.u32 %v165, 4294901760
      %1276 = vmatpush1.msra.mxu0 %v1275
      %1277 = vmatprep.subr.mxu0 0.0
      %v1278 = vand.u32 %v166, 4294901760
      %1279 = vmatpush1.msra.mxu0 %v1278
      %1280 = vmatprep.subr.mxu0 0.0
      %1281 = vmatpush1.msra.mxu0 0.0
      %1282 = vmatprep.subr.mxu0 0.0
      %1283 = vmatpush1.msra.mxu0 0.0
      %1284 = vmatprep.subr.mxu0 0.0
      %1285 = vmatpush1.msra.mxu0 0.0
      %1286 = vmatprep.subr.mxu0 0.0
      %1287 = vmatpush1.msra.mxu0 0.0
      %1288 = vmatprep.subr.mxu0 0.0
      %1289 = vmatpush1.msra.mxu0 0.0
      %1290 = vmatprep.subr.mxu0 0.0
      %1291 = vmatpush1.msra.mxu0 0.0
      %1292 = vmatprep.subr.mxu0 0.0
      %1293 = vmatpush1.msra.mxu0 0.0
      %1294 = vmatprep.subr.mxu0 0.0
      %1295 = vmatpush1.msra.mxu0 0.0
      %1296 = vmatprep.subr.mxu0 0.0
      %1297 = vmatpush1.msra.mxu0 0.0
      %1298 = vmatprep.subr.mxu0 0.0
      %1299 = vmatpush1.msra.mxu0 0.0
      %1300 = vmatprep.subr.mxu0 0.0
      %1301 = vmatpush1.msra.mxu0 0.0
      %1302 = vmatprep.subr.mxu0 0.0
      %1303 = vmatpush1.msra.mxu0 0.0
      %1304 = vmatprep.subr.mxu0 0.0
      %1305 = vmatpush1.msra.mxu0 0.0
      %1306 = vmatprep.subr.mxu0 0.0
      %1307 = vmatpush1.msra.mxu0 0.0
      %1308 = vmatprep.subr.mxu0 0.0
      %1309 = vmatpush1.msra.mxu0 0.0
      %1310 = vmatprep.subr.mxu0 0.0
      %1311 = vmatpush1.msra.mxu0 0.0
      %1312 = vmatprep.subr.mxu0 0.0
      %1313 = vmatpush1.msra.mxu0 0.0
      %1314 = vmatprep.subr.mxu0 0.0
      %1315 = vmatpush1.msra.mxu0 0.0
      %1316 = vmatprep.subr.mxu0 0.0
      %1317 = vmatpush1.msra.mxu0 0.0
      %1318 = vmatprep.subr.mxu0 0.0
      %1319 = vmatpush1.msra.mxu0 0.0
      %1320 = vmatprep.subr.mxu0 0.0
      %1321 = vmatpush1.msra.mxu0 0.0
      %1322 = vmatprep.subr.mxu0 0.0
      %1323 = vmatpush1.msra.mxu0 0.0
      %1324 = vmatprep.subr.mxu0 0.0
      %1325 = vmatpush1.msra.mxu0 0.0
      %1326 = vmatprep.subr.mxu0 0.0
      %1327 = vmatpush1.msra.mxu0 0.0
      %1328 = vmatprep.subr.mxu0 0.0
      %1329 = vmatpush1.msra.mxu0 0.0
      %1330 = vmatprep.subr.mxu0 0.0
      %1331 = vmatpush1.msra.mxu0 0.0
      %1332 = vmatprep.subr.mxu0 0.0
      %1333 = vmatpush1.msra.mxu0 0.0
      %1334 = vmatprep.subr.mxu0 0.0
      %1335 = vmatpush1.msra.mxu0 0.0
      %1336 = vmatprep.subr.mxu0 0.0
      %1337 = vmatpush1.msra.mxu0 0.0
      %1338 = vmatprep.subr.mxu0 0.0
      %1339 = vmatpush1.msra.mxu0 0.0
      %1340 = vmatprep.mubr.f32.mxu0 0.0
      %v1341 = vand.u32 %v173, 4294901760
      %1342 = vmatmul.mubr.f32.gmra.mrb[0].mxu0 %v1341
      %v1343 = vpop.f32.mrb[0].mxu0
      %v1344 = vadd.f32 %v1253, %v1343
      %v1345 = vpop.f32.mrb[0].mxu0
      %1346 = vmatprep.mubr.f32.mxu0 0.0
      %v1347 = vand.u32 %v176, 4294901760
      %1348 = vmatmul.mubr.f32.gmra.mrb[0].mxu0 %v1347
      %v1349 = vpop.f32.mrb[0].mxu0
      %v1350 = vadd.f32 %v1259, %v1349
      %v1351 = vpop.f32.mrb[0].mxu0
      %1352 = vmatprep.mubr.f32.mxu0 0.0
      %v1353 = vand.u32 %v179, 4294901760
      %1354 = vmatmul.mubr.f32.gmra.mrb[0].mxu0 %v1353
      %v1355 = vpop.f32.mrb[0].mxu0
      %v1356 = vadd.f32 %v1265, %v1355
      %v1357 = vpop.f32.mrb[0].mxu0
      %1358 = vmatprep.mubr.f32.mxu0 0.0
      %v1359 = vand.u32 %v182, 4294901760
      %1360 = vmatmul.mubr.f32.gmra.mrb[0].mxu0 %v1359
      %v1361 = vpop.f32.mrb[0].mxu0
      %v1362 = vadd.f32 %v1271, %v1361
      %v1363 = vpop.f32.mrb[0].mxu0
      %1364 = vdwg.mxu0
      %s1365 = scalar_lea.vmem %s147, 32
      %1366 = vst.msk [vmem:[%s1365] sm:$0xff] %vm772, %v1344
      %1367 = vst.msk [vmem:[%s1365 + $0x8] sm:$0xff] %vm772, %v1350
      %1368 = vst.msk [vmem:[%s1365 + $0x10] sm:$0xff] %vm772, %v1356
      %1369 = vst.msk [vmem:[%s1365 + $0x18] sm:$0xff] %vm772, %v1362
      %v1370 = vld [vmem:[%s139] sm:$0xff]
      %v1371 = vld [vmem:[%s139 + $0x8] sm:$0xff]
      %v1372 = vld [vmem:[%s139 + $0x10] sm:$0xff]
      %v1373 = vld [vmem:[%s139 + $0x18] sm:$0xff]
      %1378 = vrot.lane.b32.xlu0 %v1370, 112
      %v1379 = vpop.permute.xlu0 %1378
      %1380 = vrot.lane.b32.xlu0 %v1371, 112
      %v1381 = vpop.permute.xlu0 %1380
      %1382 = vrot.lane.b32.xlu0 %v1372, 112
      %v1383 = vpop.permute.xlu0 %1382
      %1384 = vrot.lane.b32.xlu0 %v1373, 112
      %v1385 = vpop.permute.xlu0 %1384
      %v1386 = vsel %vm171, %v1379, 0
      %v1388 = vsel %vm171, %v1381, 0
      %v1390 = vsel %vm171, %v1383, 0
      %v1392 = vsel %vm171, %v1385, 0
      %1394 = vmatprep.subr.mxu0 0.0
      %v1395 = vand.u32 %v158, 4294901760
      %1396 = vmatpush1.msra.mxu0 %v1395
      %1397 = vmatprep.subr.mxu0 0.0
      %v1398 = vand.u32 %v159, 4294901760
      %1399 = vmatpush1.msra.mxu0 %v1398
      %1400 = vmatprep.subr.mxu0 0.0
      %1401 = vmatpush1.msra.mxu0 0.0
      %1402 = vmatprep.subr.mxu0 0.0
      %1403 = vmatpush1.msra.mxu0 0.0
      %1404 = vmatprep.subr.mxu0 0.0
      %1405 = vmatpush1.msra.mxu0 0.0
      %1406 = vmatprep.subr.mxu0 0.0
      %1407 = vmatpush1.msra.mxu0 0.0
      %1408 = vmatprep.subr.mxu0 0.0
      %1409 = vmatpush1.msra.mxu0 0.0
      %1410 = vmatprep.subr.mxu0 0.0
      %1411 = vmatpush1.msra.mxu0 0.0
      %1412 = vmatprep.subr.mxu0 0.0
      %1413 = vmatpush1.msra.mxu0 0.0
      %1414 = vmatprep.subr.mxu0 0.0
      %1415 = vmatpush1.msra.mxu0 0.0
      %1416 = vmatprep.subr.mxu0 0.0
      %1417 = vmatpush1.msra.mxu0 0.0
      %1418 = vmatprep.subr.mxu0 0.0
      %1419 = vmatpush1.msra.mxu0 0.0
      %1420 = vmatprep.subr.mxu0 0.0
      %1421 = vmatpush1.msra.mxu0 0.0
      %1422 = vmatprep.subr.mxu0 0.0
      %1423 = vmatpush1.msra.mxu0 0.0
      %1424 = vmatprep.subr.mxu0 0.0
      %1425 = vmatpush1.msra.mxu0 0.0
      %1426 = vmatprep.subr.mxu0 0.0
      %1427 = vmatpush1.msra.mxu0 0.0
      %1428 = vmatprep.subr.mxu0 0.0
      %1429 = vmatpush1.msra.mxu0 0.0
      %1430 = vmatprep.subr.mxu0 0.0
      %1431 = vmatpush1.msra.mxu0 0.0
      %1432 = vmatprep.subr.mxu0 0.0
      %1433 = vmatpush1.msra.mxu0 0.0
      %1434 = vmatprep.subr.mxu0 0.0
      %1435 = vmatpush1.msra.mxu0 0.0
      %1436 = vmatprep.subr.mxu0 0.0
      %1437 = vmatpush1.msra.mxu0 0.0
      %1438 = vmatprep.subr.mxu0 0.0
      %1439 = vmatpush1.msra.mxu0 0.0
      %1440 = vmatprep.subr.mxu0 0.0
      %1441 = vmatpush1.msra.mxu0 0.0
      %1442 = vmatprep.subr.mxu0 0.0
      %1443 = vmatpush1.msra.mxu0 0.0
      %1444 = vmatprep.subr.mxu0 0.0
      %1445 = vmatpush1.msra.mxu0 0.0
      %1446 = vmatprep.subr.mxu0 0.0
      %1447 = vmatpush1.msra.mxu0 0.0
      %1448 = vmatprep.subr.mxu0 0.0
      %1449 = vmatpush1.msra.mxu0 0.0
      %1450 = vmatprep.subr.mxu0 0.0
      %1451 = vmatpush1.msra.mxu0 0.0
      %1452 = vmatprep.subr.mxu0 0.0
      %1453 = vmatpush1.msra.mxu0 0.0
      %1454 = vmatprep.subr.mxu0 0.0
      %1455 = vmatpush1.msra.mxu0 0.0
      %1456 = vmatprep.subr.mxu0 0.0
      %1457 = vmatpush1.msra.mxu0 0.0
      %1458 = vmatprep.subr.mxu0 0.0
      %1459 = vmatpush1.msra.mxu0 0.0
      %1460 = vmatprep.mubr.f32.mxu0 0.0
      %v1461 = vand.u32 %v1386, 4294901760
      %v1462 = vsub.f32 %v1386, %v1461
      %v1463 = vand.u32 %v1462, 4294901760
      %v1464 = vsub.f32 %v1462, %v1463
      %v1465 = vand.u32 %v1464, 4294901760
      %1466 = vmatmul.mubr.f32.gmra.mrb[0].mxu0 %v1465
      %v1467 = vpop.f32.mrb[0].mxu0
      %v1468 = vadd.f32 0.0, %v1467
      %v1469 = vpop.f32.mrb[0].mxu0
      %1470 = vmatprep.mubr.f32.mxu0 0.0
      %v1471 = vand.u32 %v1388, 4294901760
      %v1472 = vsub.f32 %v1388, %v1471
      %v1473 = vand.u32 %v1472, 4294901760
      %v1474 = vsub.f32 %v1472, %v1473
      %v1475 = vand.u32 %v1474, 4294901760
      %1476 = vmatmul.mubr.f32.gmra.mrb[0].mxu0 %v1475
      %v1477 = vpop.f32.mrb[0].mxu0
      %v1478 = vadd.f32 0.0, %v1477
      %v1479 = vpop.f32.mrb[0].mxu0
      %1480 = vmatprep.mubr.f32.mxu0 0.0
      %v1481 = vand.u32 %v1390, 4294901760
      %v1482 = vsub.f32 %v1390, %v1481
      %v1483 = vand.u32 %v1482, 4294901760
      %v1484 = vsub.f32 %v1482, %v1483
      %v1485 = vand.u32 %v1484, 4294901760
      %1486 = vmatmul.mubr.f32.gmra.mrb[0].mxu0 %v1485
      %v1487 = vpop.f32.mrb[0].mxu0
      %v1488 = vadd.f32 0.0, %v1487
      %v1489 = vpop.f32.mrb[0].mxu0
      %1490 = vmatprep.mubr.f32.mxu0 0.0
      %v1491 = vand.u32 %v1392, 4294901760
      %v1492 = vsub.f32 %v1392, %v1491
      %v1493 = vand.u32 %v1492, 4294901760
      %v1494 = vsub.f32 %v1492, %v1493
      %v1495 = vand.u32 %v1494, 4294901760
      %1496 = vmatmul.mubr.f32.gmra.mrb[0].mxu0 %v1495
      %v1497 = vpop.f32.mrb[0].mxu0
      %v1498 = vadd.f32 0.0, %v1497
      %v1499 = vpop.f32.mrb[0].mxu0
      %1500 = vdwg.mxu0
      %1501 = vmatprep.subr.mxu0 0.0
      %v1502 = vand.u32 %v158, 4294901760
      %v1503 = vsub.f32 %v158, %v1502
      %v1504 = vand.u32 %v1503, 4294901760
      %v1505 = vsub.f32 %v1503, %v1504
      %v1506 = vand.u32 %v1505, 4294901760
      %1507 = vmatpush1.msra.mxu0 %v1506
      %1508 = vmatprep.subr.mxu0 0.0
      %v1509 = vand.u32 %v159, 4294901760
      %v1510 = vsub.f32 %v159, %v1509
      %v1511 = vand.u32 %v1510, 4294901760
      %v1512 = vsub.f32 %v1510, %v1511
      %v1513 = vand.u32 %v1512, 4294901760
      %1514 = vmatpush1.msra.mxu0 %v1513
      %1515 = vmatprep.subr.mxu0 0.0
      %1516 = vmatpush1.msra.mxu0 0.0
      %1517 = vmatprep.subr.mxu0 0.0
      %1518 = vmatpush1.msra.mxu0 0.0
      %1519 = vmatprep.subr.mxu0 0.0
      %1520 = vmatpush1.msra.mxu0 0.0
      %1521 = vmatprep.subr.mxu0 0.0
      %1522 = vmatpush1.msra.mxu0 0.0
      %1523 = vmatprep.subr.mxu0 0.0
      %1524 = vmatpush1.msra.mxu0 0.0
      %1525 = vmatprep.subr.mxu0 0.0
      %1526 = vmatpush1.msra.mxu0 0.0
      %1527 = vmatprep.subr.mxu0 0.0
      %1528 = vmatpush1.msra.mxu0 0.0
      %1529 = vmatprep.subr.mxu0 0.0
      %1530 = vmatpush1.msra.mxu0 0.0
      %1531 = vmatprep.subr.mxu0 0.0
      %1532 = vmatpush1.msra.mxu0 0.0
      %1533 = vmatprep.subr.mxu0 0.0
      %1534 = vmatpush1.msra.mxu0 0.0
      %1535 = vmatprep.subr.mxu0 0.0
      %1536 = vmatpush1.msra.mxu0 0.0
      %1537 = vmatprep.subr.mxu0 0.0
      %1538 = vmatpush1.msra.mxu0 0.0
      %1539 = vmatprep.subr.mxu0 0.0
      %1540 = vmatpush1.msra.mxu0 0.0
      %1541 = vmatprep.subr.mxu0 0.0
      %1542 = vmatpush1.msra.mxu0 0.0
      %1543 = vmatprep.subr.mxu0 0.0
      %1544 = vmatpush1.msra.mxu0 0.0
      %1545 = vmatprep.subr.mxu0 0.0
      %1546 = vmatpush1.msra.mxu0 0.0
      %1547 = vmatprep.subr.mxu0 0.0
      %1548 = vmatpush1.msra.mxu0 0.0
      %1549 = vmatprep.subr.mxu0 0.0
      %1550 = vmatpush1.msra.mxu0 0.0
      %1551 = vmatprep.subr.mxu0 0.0
      %1552 = vmatpush1.msra.mxu0 0.0
      %1553 = vmatprep.subr.mxu0 0.0
      %1554 = vmatpush1.msra.mxu0 0.0
      %1555 = vmatprep.subr.mxu0 0.0
      %1556 = vmatpush1.msra.mxu0 0.0
      %1557 = vmatprep.subr.mxu0 0.0
      %1558 = vmatpush1.msra.mxu0 0.0
      %1559 = vmatprep.subr.mxu0 0.0
      %1560 = vmatpush1.msra.mxu0 0.0
      %1561 = vmatprep.subr.mxu0 0.0
      %1562 = vmatpush1.msra.mxu0 0.0
      %1563 = vmatprep.subr.mxu0 0.0
      %1564 = vmatpush1.msra.mxu0 0.0
      %1565 = vmatprep.subr.mxu0 0.0
      %1566 = vmatpush1.msra.mxu0 0.0
      %1567 = vmatprep.subr.mxu0 0.0
      %1568 = vmatpush1.msra.mxu0 0.0
      %1569 = vmatprep.subr.mxu0 0.0
      %1570 = vmatpush1.msra.mxu0 0.0
      %1571 = vmatprep.subr.mxu0 0.0
      %1572 = vmatpush1.msra.mxu0 0.0
      %1573 = vmatprep.subr.mxu0 0.0
      %1574 = vmatpush1.msra.mxu0 0.0
      %1575 = vmatprep.mubr.f32.mxu0 0.0
      %v1576 = vand.u32 %v1386, 4294901760
      %1577 = vmatmul.mubr.f32.gmra.mrb[0].mxu0 %v1576
      %v1578 = vpop.f32.mrb[0].mxu0
      %v1579 = vadd.f32 %v1468, %v1578
      %v1580 = vpop.f32.mrb[0].mxu0
      %1581 = vmatprep.mubr.f32.mxu0 0.0
      %v1582 = vand.u32 %v1388, 4294901760
      %1583 = vmatmul.mubr.f32.gmra.mrb[0].mxu0 %v1582
      %v1584 = vpop.f32.mrb[0].mxu0
      %v1585 = vadd.f32 %v1478, %v1584
      %v1586 = vpop.f32.mrb[0].mxu0
      %1587 = vmatprep.mubr.f32.mxu0 0.0
      %v1588 = vand.u32 %v1390, 4294901760
      %1589 = vmatmul.mubr.f32.gmra.mrb[0].mxu0 %v1588
      %v1590 = vpop.f32.mrb[0].mxu0
      %v1591 = vadd.f32 %v1488, %v1590
      %v1592 = vpop.f32.mrb[0].mxu0
      %1593 = vmatprep.mubr.f32.mxu0 0.0
      %v1594 = vand.u32 %v1392, 4294901760
      %1595 = vmatmul.mubr.f32.gmra.mrb[0].mxu0 %v1594
      %v1596 = vpop.f32.mrb[0].mxu0
      %v1597 = vadd.f32 %v1498, %v1596
      %v1598 = vpop.f32.mrb[0].mxu0
      %1599 = vdwg.mxu0
      %1600 = vmatprep.subr.mxu0 0.0
      %v1601 = vand.u32 %v158, 4294901760
      %v1602 = vsub.f32 %v158, %v1601
      %1603 = vmatpush1.msra.mxu0 %v1602
      %1604 = vmatprep.subr.mxu0 0.0
      %v1605 = vand.u32 %v159, 4294901760
      %v1606 = vsub.f32 %v159, %v1605
      %1607 = vmatpush1.msra.mxu0 %v1606
      %1608 = vmatprep.subr.mxu0 0.0
      %1609 = vmatpush1.msra.mxu0 0.0
      %1610 = vmatprep.subr.mxu0 0.0
      %1611 = vmatpush1.msra.mxu0 0.0
      %1612 = vmatprep.subr.mxu0 0.0
      %1613 = vmatpush1.msra.mxu0 0.0
      %1614 = vmatprep.subr.mxu0 0.0
      %1615 = vmatpush1.msra.mxu0 0.0
      %1616 = vmatprep.subr.mxu0 0.0
      %1617 = vmatpush1.msra.mxu0 0.0
      %1618 = vmatprep.subr.mxu0 0.0
      %1619 = vmatpush1.msra.mxu0 0.0
      %1620 = vmatprep.subr.mxu0 0.0
      %1621 = vmatpush1.msra.mxu0 0.0
      %1622 = vmatprep.subr.mxu0 0.0
      %1623 = vmatpush1.msra.mxu0 0.0
      %1624 = vmatprep.subr.mxu0 0.0
      %1625 = vmatpush1.msra.mxu0 0.0
      %1626 = vmatprep.subr.mxu0 0.0
      %1627 = vmatpush1.msra.mxu0 0.0
      %1628 = vmatprep.subr.mxu0 0.0
      %1629 = vmatpush1.msra.mxu0 0.0
      %1630 = vmatprep.subr.mxu0 0.0
      %1631 = vmatpush1.msra.mxu0 0.0
      %1632 = vmatprep.subr.mxu0 0.0
      %1633 = vmatpush1.msra.mxu0 0.0
      %1634 = vmatprep.subr.mxu0 0.0
      %1635 = vmatpush1.msra.mxu0 0.0
      %1636 = vmatprep.subr.mxu0 0.0
      %1637 = vmatpush1.msra.mxu0 0.0
      %1638 = vmatprep.subr.mxu0 0.0
      %1639 = vmatpush1.msra.mxu0 0.0
      %1640 = vmatprep.subr.mxu0 0.0
      %1641 = vmatpush1.msra.mxu0 0.0
      %1642 = vmatprep.subr.mxu0 0.0
      %1643 = vmatpush1.msra.mxu0 0.0
      %1644 = vmatprep.subr.mxu0 0.0
      %1645 = vmatpush1.msra.mxu0 0.0
      %1646 = vmatprep.subr.mxu0 0.0
      %1647 = vmatpush1.msra.mxu0 0.0
      %1648 = vmatprep.subr.mxu0 0.0
      %1649 = vmatpush1.msra.mxu0 0.0
      %1650 = vmatprep.subr.mxu0 0.0
      %1651 = vmatpush1.msra.mxu0 0.0
      %1652 = vmatprep.subr.mxu0 0.0
      %1653 = vmatpush1.msra.mxu0 0.0
      %1654 = vmatprep.subr.mxu0 0.0
      %1655 = vmatpush1.msra.mxu0 0.0
      %1656 = vmatprep.subr.mxu0 0.0
      %1657 = vmatpush1.msra.mxu0 0.0
      %1658 = vmatprep.subr.mxu0 0.0
      %1659 = vmatpush1.msra.mxu0 0.0
      %1660 = vmatprep.subr.mxu0 0.0
      %1661 = vmatpush1.msra.mxu0 0.0
      %1662 = vmatprep.subr.mxu0 0.0
      %1663 = vmatpush1.msra.mxu0 0.0
      %1664 = vmatprep.subr.mxu0 0.0
      %1665 = vmatpush1.msra.mxu0 0.0
      %1666 = vmatprep.subr.mxu0 0.0
      %1667 = vmatpush1.msra.mxu0 0.0
      %1668 = vmatprep.mubr.f32.mxu0 0.0
      %v1669 = vand.u32 %v1386, 4294901760
      %v1670 = vsub.f32 %v1386, %v1669
      %1671 = vmatmul.mubr.f32.gmra.mrb[0].mxu0 %v1670
      %v1672 = vpop.f32.mrb[0].mxu0
      %v1673 = vadd.f32 %v1579, %v1672
      %v1674 = vpop.f32.mrb[0].mxu0
      %1675 = vmatprep.mubr.f32.mxu0 0.0
      %v1676 = vand.u32 %v1388, 4294901760
      %v1677 = vsub.f32 %v1388, %v1676
      %1678 = vmatmul.mubr.f32.gmra.mrb[0].mxu0 %v1677
      %v1679 = vpop.f32.mrb[0].mxu0
      %v1680 = vadd.f32 %v1585, %v1679
      %v1681 = vpop.f32.mrb[0].mxu0
      %1682 = vmatprep.mubr.f32.mxu0 0.0
      %v1683 = vand.u32 %v1390, 4294901760
      %v1684 = vsub.f32 %v1390, %v1683
      %1685 = vmatmul.mubr.f32.gmra.mrb[0].mxu0 %v1684
      %v1686 = vpop.f32.mrb[0].mxu0
      %v1687 = vadd.f32 %v1591, %v1686
      %v1688 = vpop.f32.mrb[0].mxu0
      %1689 = vmatprep.mubr.f32.mxu0 0.0
      %v1690 = vand.u32 %v1392, 4294901760
      %v1691 = vsub.f32 %v1392, %v1690
      %1692 = vmatmul.mubr.f32.gmra.mrb[0].mxu0 %v1691
      %v1693 = vpop.f32.mrb[0].mxu0
      %v1694 = vadd.f32 %v1597, %v1693
      %v1695 = vpop.f32.mrb[0].mxu0
      %1696 = vdwg.mxu0
      %1697 = vmatprep.subr.mxu0 0.0
      %v1698 = vand.u32 %v158, 4294901760
      %1699 = vmatpush1.msra.mxu0 %v1698
      %1700 = vmatprep.subr.mxu0 0.0
      %v1701 = vand.u32 %v159, 4294901760
      %1702 = vmatpush1.msra.mxu0 %v1701
      %1703 = vmatprep.subr.mxu0 0.0
      %1704 = vmatpush1.msra.mxu0 0.0
      %1705 = vmatprep.subr.mxu0 0.0
      %1706 = vmatpush1.msra.mxu0 0.0
      %1707 = vmatprep.subr.mxu0 0.0
      %1708 = vmatpush1.msra.mxu0 0.0
      %1709 = vmatprep.subr.mxu0 0.0
      %1710 = vmatpush1.msra.mxu0 0.0
      %1711 = vmatprep.subr.mxu0 0.0
      %1712 = vmatpush1.msra.mxu0 0.0
      %1713 = vmatprep.subr.mxu0 0.0
      %1714 = vmatpush1.msra.mxu0 0.0
      %1715 = vmatprep.subr.mxu0 0.0
      %1716 = vmatpush1.msra.mxu0 0.0
      %1717 = vmatprep.subr.mxu0 0.0
      %1718 = vmatpush1.msra.mxu0 0.0
      %1719 = vmatprep.subr.mxu0 0.0
      %1720 = vmatpush1.msra.mxu0 0.0
      %1721 = vmatprep.subr.mxu0 0.0
      %1722 = vmatpush1.msra.mxu0 0.0
      %1723 = vmatprep.subr.mxu0 0.0
      %1724 = vmatpush1.msra.mxu0 0.0
      %1725 = vmatprep.subr.mxu0 0.0
      %1726 = vmatpush1.msra.mxu0 0.0
      %1727 = vmatprep.subr.mxu0 0.0
      %1728 = vmatpush1.msra.mxu0 0.0
      %1729 = vmatprep.subr.mxu0 0.0
      %1730 = vmatpush1.msra.mxu0 0.0
      %1731 = vmatprep.subr.mxu0 0.0
      %1732 = vmatpush1.msra.mxu0 0.0
      %1733 = vmatprep.subr.mxu0 0.0
      %1734 = vmatpush1.msra.mxu0 0.0
      %1735 = vmatprep.subr.mxu0 0.0
      %1736 = vmatpush1.msra.mxu0 0.0
      %1737 = vmatprep.subr.mxu0 0.0
      %1738 = vmatpush1.msra.mxu0 0.0
      %1739 = vmatprep.subr.mxu0 0.0
      %1740 = vmatpush1.msra.mxu0 0.0
      %1741 = vmatprep.subr.mxu0 0.0
      %1742 = vmatpush1.msra.mxu0 0.0
      %1743 = vmatprep.subr.mxu0 0.0
      %1744 = vmatpush1.msra.mxu0 0.0
      %1745 = vmatprep.subr.mxu0 0.0
      %1746 = vmatpush1.msra.mxu0 0.0
      %1747 = vmatprep.subr.mxu0 0.0
      %1748 = vmatpush1.msra.mxu0 0.0
      %1749 = vmatprep.subr.mxu0 0.0
      %1750 = vmatpush1.msra.mxu0 0.0
      %1751 = vmatprep.subr.mxu0 0.0
      %1752 = vmatpush1.msra.mxu0 0.0
      %1753 = vmatprep.subr.mxu0 0.0
      %1754 = vmatpush1.msra.mxu0 0.0
      %1755 = vmatprep.subr.mxu0 0.0
      %1756 = vmatpush1.msra.mxu0 0.0
      %1757 = vmatprep.subr.mxu0 0.0
      %1758 = vmatpush1.msra.mxu0 0.0
      %1759 = vmatprep.subr.mxu0 0.0
      %1760 = vmatpush1.msra.mxu0 0.0
      %1761 = vmatprep.subr.mxu0 0.0
      %1762 = vmatpush1.msra.mxu0 0.0
      %1763 = vmatprep.mubr.f32.mxu0 0.0
      %v1764 = vand.u32 %v1386, 4294901760
      %v1765 = vsub.f32 %v1386, %v1764
      %v1766 = vand.u32 %v1765, 4294901760
      %1767 = vmatmul.mubr.f32.gmra.mrb[0].mxu0 %v1766
      %v1768 = vpop.f32.mrb[0].mxu0
      %v1769 = vadd.f32 %v1673, %v1768
      %v1770 = vpop.f32.mrb[0].mxu0
      %1771 = vmatprep.mubr.f32.mxu0 0.0
      %v1772 = vand.u32 %v1388, 4294901760
      %v1773 = vsub.f32 %v1388, %v1772
      %v1774 = vand.u32 %v1773, 4294901760
      %1775 = vmatmul.mubr.f32.gmra.mrb[0].mxu0 %v1774
      %v1776 = vpop.f32.mrb[0].mxu0
      %v1777 = vadd.f32 %v1680, %v1776
      %v1778 = vpop.f32.mrb[0].mxu0
      %1779 = vmatprep.mubr.f32.mxu0 0.0
      %v1780 = vand.u32 %v1390, 4294901760
      %v1781 = vsub.f32 %v1390, %v1780
      %v1782 = vand.u32 %v1781, 4294901760
      %1783 = vmatmul.mubr.f32.gmra.mrb[0].mxu0 %v1782
      %v1784 = vpop.f32.mrb[0].mxu0
      %v1785 = vadd.f32 %v1687, %v1784
      %v1786 = vpop.f32.mrb[0].mxu0
      %1787 = vmatprep.mubr.f32.mxu0 0.0
      %v1788 = vand.u32 %v1392, 4294901760
      %v1789 = vsub.f32 %v1392, %v1788
      %v1790 = vand.u32 %v1789, 4294901760
      %1791 = vmatmul.mubr.f32.gmra.mrb[0].mxu0 %v1790
      %v1792 = vpop.f32.mrb[0].mxu0
      %v1793 = vadd.f32 %v1694, %v1792
      %v1794 = vpop.f32.mrb[0].mxu0
      %1795 = vdwg.mxu0
      %1796 = vmatprep.subr.mxu0 0.0
      %v1797 = vand.u32 %v158, 4294901760
      %v1798 = vsub.f32 %v158, %v1797
      %v1799 = vand.u32 %v1798, 4294901760
      %1800 = vmatpush1.msra.mxu0 %v1799
      %1801 = vmatprep.subr.mxu0 0.0
      %v1802 = vand.u32 %v159, 4294901760
      %v1803 = vsub.f32 %v159, %v1802
      %v1804 = vand.u32 %v1803, 4294901760
      %1805 = vmatpush1.msra.mxu0 %v1804
      %1806 = vmatprep.subr.mxu0 0.0
      %1807 = vmatpush1.msra.mxu0 0.0
      %1808 = vmatprep.subr.mxu0 0.0
      %1809 = vmatpush1.msra.mxu0 0.0
      %1810 = vmatprep.subr.mxu0 0.0
      %1811 = vmatpush1.msra.mxu0 0.0
      %1812 = vmatprep.subr.mxu0 0.0
      %1813 = vmatpush1.msra.mxu0 0.0
      %1814 = vmatprep.subr.mxu0 0.0
      %1815 = vmatpush1.msra.mxu0 0.0
      %1816 = vmatprep.subr.mxu0 0.0
      %1817 = vmatpush1.msra.mxu0 0.0
      %1818 = vmatprep.subr.mxu0 0.0
      %1819 = vmatpush1.msra.mxu0 0.0
      %1820 = vmatprep.subr.mxu0 0.0
      %1821 = vmatpush1.msra.mxu0 0.0
      %1822 = vmatprep.subr.mxu0 0.0
      %1823 = vmatpush1.msra.mxu0 0.0
      %1824 = vmatprep.subr.mxu0 0.0
      %1825 = vmatpush1.msra.mxu0 0.0
      %1826 = vmatprep.subr.mxu0 0.0
      %1827 = vmatpush1.msra.mxu0 0.0
      %1828 = vmatprep.subr.mxu0 0.0
      %1829 = vmatpush1.msra.mxu0 0.0
      %1830 = vmatprep.subr.mxu0 0.0
      %1831 = vmatpush1.msra.mxu0 0.0
      %1832 = vmatprep.subr.mxu0 0.0
      %1833 = vmatpush1.msra.mxu0 0.0
      %1834 = vmatprep.subr.mxu0 0.0
      %1835 = vmatpush1.msra.mxu0 0.0
      %1836 = vmatprep.subr.mxu0 0.0
      %1837 = vmatpush1.msra.mxu0 0.0
      %1838 = vmatprep.subr.mxu0 0.0
      %1839 = vmatpush1.msra.mxu0 0.0
      %1840 = vmatprep.subr.mxu0 0.0
      %1841 = vmatpush1.msra.mxu0 0.0
      %1842 = vmatprep.subr.mxu0 0.0
      %1843 = vmatpush1.msra.mxu0 0.0
      %1844 = vmatprep.subr.mxu0 0.0
      %1845 = vmatpush1.msra.mxu0 0.0
      %1846 = vmatprep.subr.mxu0 0.0
      %1847 = vmatpush1.msra.mxu0 0.0
      %1848 = vmatprep.subr.mxu0 0.0
      %1849 = vmatpush1.msra.mxu0 0.0
      %1850 = vmatprep.subr.mxu0 0.0
      %1851 = vmatpush1.msra.mxu0 0.0
      %1852 = vmatprep.subr.mxu0 0.0
      %1853 = vmatpush1.msra.mxu0 0.0
      %1854 = vmatprep.subr.mxu0 0.0
      %1855 = vmatpush1.msra.mxu0 0.0
      %1856 = vmatprep.subr.mxu0 0.0
      %1857 = vmatpush1.msra.mxu0 0.0
      %1858 = vmatprep.subr.mxu0 0.0
      %1859 = vmatpush1.msra.mxu0 0.0
      %1860 = vmatprep.subr.mxu0 0.0
      %1861 = vmatpush1.msra.mxu0 0.0
      %1862 = vmatprep.subr.mxu0 0.0
      %1863 = vmatpush1.msra.mxu0 0.0
      %1864 = vmatprep.subr.mxu0 0.0
      %1865 = vmatpush1.msra.mxu0 0.0
      %1866 = vmatprep.mubr.f32.mxu0 0.0
      %v1867 = vand.u32 %v1386, 4294901760
      %1868 = vmatmul.mubr.f32.gmra.mrb[0].mxu0 %v1867
      %v1869 = vpop.f32.mrb[0].mxu0
      %v1870 = vadd.f32 %v1769, %v1869
      %v1871 = vpop.f32.mrb[0].mxu0
      %1872 = vmatprep.mubr.f32.mxu0 0.0
      %v1873 = vand.u32 %v1388, 4294901760
      %1874 = vmatmul.mubr.f32.gmra.mrb[0].mxu0 %v1873
      %v1875 = vpop.f32.mrb[0].mxu0
      %v1876 = vadd.f32 %v1777, %v1875
      %v1877 = vpop.f32.mrb[0].mxu0
      %1878 = vmatprep.mubr.f32.mxu0 0.0
      %v1879 = vand.u32 %v1390, 4294901760
      %1880 = vmatmul.mubr.f32.gmra.mrb[0].mxu0 %v1879
      %v1881 = vpop.f32.mrb[0].mxu0
      %v1882 = vadd.f32 %v1785, %v1881
      %v1883 = vpop.f32.mrb[0].mxu0
      %1884 = vmatprep.mubr.f32.mxu0 0.0
      %v1885 = vand.u32 %v1392, 4294901760
      %1886 = vmatmul.mubr.f32.gmra.mrb[0].mxu0 %v1885
      %v1887 = vpop.f32.mrb[0].mxu0
      %v1888 = vadd.f32 %v1793, %v1887
      %v1889 = vpop.f32.mrb[0].mxu0
      %1890 = vdwg.mxu0
      %1891 = vmatprep.subr.mxu0 0.0
      %v1892 = vand.u32 %v158, 4294901760
      %1893 = vmatpush1.msra.mxu0 %v1892
      %1894 = vmatprep.subr.mxu0 0.0
      %v1895 = vand.u32 %v159, 4294901760
      %1896 = vmatpush1.msra.mxu0 %v1895
      %1897 = vmatprep.subr.mxu0 0.0
      %1898 = vmatpush1.msra.mxu0 0.0
      %1899 = vmatprep.subr.mxu0 0.0
      %1900 = vmatpush1.msra.mxu0 0.0
      %1901 = vmatprep.subr.mxu0 0.0
      %1902 = vmatpush1.msra.mxu0 0.0
      %1903 = vmatprep.subr.mxu0 0.0
      %1904 = vmatpush1.msra.mxu0 0.0
      %1905 = vmatprep.subr.mxu0 0.0
      %1906 = vmatpush1.msra.mxu0 0.0
      %1907 = vmatprep.subr.mxu0 0.0
      %1908 = vmatpush1.msra.mxu0 0.0
      %1909 = vmatprep.subr.mxu0 0.0
      %1910 = vmatpush1.msra.mxu0 0.0
      %1911 = vmatprep.subr.mxu0 0.0
      %1912 = vmatpush1.msra.mxu0 0.0
      %1913 = vmatprep.subr.mxu0 0.0
      %1914 = vmatpush1.msra.mxu0 0.0
      %1915 = vmatprep.subr.mxu0 0.0
      %1916 = vmatpush1.msra.mxu0 0.0
      %1917 = vmatprep.subr.mxu0 0.0
      %1918 = vmatpush1.msra.mxu0 0.0
      %1919 = vmatprep.subr.mxu0 0.0
      %1920 = vmatpush1.msra.mxu0 0.0
      %1921 = vmatprep.subr.mxu0 0.0
      %1922 = vmatpush1.msra.mxu0 0.0
      %1923 = vmatprep.subr.mxu0 0.0
      %1924 = vmatpush1.msra.mxu0 0.0
      %1925 = vmatprep.subr.mxu0 0.0
      %1926 = vmatpush1.msra.mxu0 0.0
      %1927 = vmatprep.subr.mxu0 0.0
      %1928 = vmatpush1.msra.mxu0 0.0
      %1929 = vmatprep.subr.mxu0 0.0
      %1930 = vmatpush1.msra.mxu0 0.0
      %1931 = vmatprep.subr.mxu0 0.0
      %1932 = vmatpush1.msra.mxu0 0.0
      %1933 = vmatprep.subr.mxu0 0.0
      %1934 = vmatpush1.msra.mxu0 0.0
      %1935 = vmatprep.subr.mxu0 0.0
      %1936 = vmatpush1.msra.mxu0 0.0
      %1937 = vmatprep.subr.mxu0 0.0
      %1938 = vmatpush1.msra.mxu0 0.0
      %1939 = vmatprep.subr.mxu0 0.0
      %1940 = vmatpush1.msra.mxu0 0.0
      %1941 = vmatprep.subr.mxu0 0.0
      %1942 = vmatpush1.msra.mxu0 0.0
      %1943 = vmatprep.subr.mxu0 0.0
      %1944 = vmatpush1.msra.mxu0 0.0
      %1945 = vmatprep.subr.mxu0 0.0
      %1946 = vmatpush1.msra.mxu0 0.0
      %1947 = vmatprep.subr.mxu0 0.0
      %1948 = vmatpush1.msra.mxu0 0.0
      %1949 = vmatprep.subr.mxu0 0.0
      %1950 = vmatpush1.msra.mxu0 0.0
      %1951 = vmatprep.subr.mxu0 0.0
      %1952 = vmatpush1.msra.mxu0 0.0
      %1953 = vmatprep.subr.mxu0 0.0
      %1954 = vmatpush1.msra.mxu0 0.0
      %1955 = vmatprep.subr.mxu0 0.0
      %1956 = vmatpush1.msra.mxu0 0.0
      %1957 = vmatprep.mubr.f32.mxu0 0.0
      %v1958 = vand.u32 %v1386, 4294901760
      %1959 = vmatmul.mubr.f32.gmra.mrb[0].mxu0 %v1958
      %v1960 = vpop.f32.mrb[0].mxu0
      %v1961 = vadd.f32 %v1870, %v1960
      %v1962 = vpop.f32.mrb[0].mxu0
      %1963 = vmatprep.mubr.f32.mxu0 0.0
      %v1964 = vand.u32 %v1388, 4294901760
      %1965 = vmatmul.mubr.f32.gmra.mrb[0].mxu0 %v1964
      %v1966 = vpop.f32.mrb[0].mxu0
      %v1967 = vadd.f32 %v1876, %v1966
      %v1968 = vpop.f32.mrb[0].mxu0
      %1969 = vmatprep.mubr.f32.mxu0 0.0
      %v1970 = vand.u32 %v1390, 4294901760
      %1971 = vmatmul.mubr.f32.gmra.mrb[0].mxu0 %v1970
      %v1972 = vpop.f32.mrb[0].mxu0
      %v1973 = vadd.f32 %v1882, %v1972
      %v1974 = vpop.f32.mrb[0].mxu0
      %1975 = vmatprep.mubr.f32.mxu0 0.0
      %v1976 = vand.u32 %v1392, 4294901760
      %1977 = vmatmul.mubr.f32.gmra.mrb[0].mxu0 %v1976
      %v1978 = vpop.f32.mrb[0].mxu0
      %v1979 = vadd.f32 %v1888, %v1978
      %v1980 = vpop.f32.mrb[0].mxu0
      %1981 = vdwg.mxu0
      %s1982 = scalar_lea.vmem %s147, 64
      %1983 = vst.msk [vmem:[%s1982] sm:$0xff] %vm772, %v1961
      %1984 = vst.msk [vmem:[%s1982 + $0x8] sm:$0xff] %vm772, %v1967
      %1985 = vst.msk [vmem:[%s1982 + $0x10] sm:$0xff] %vm772, %v1973
      %1986 = vst.msk [vmem:[%s1982 + $0x18] sm:$0xff] %vm772, %v1979
      %1987 = vmatprep.subr.mxu0 0.0
      %v1988 = vand.u32 %v165, 4294901760
      %1989 = vmatpush1.msra.mxu0 %v1988
      %1990 = vmatprep.subr.mxu0 0.0
      %v1991 = vand.u32 %v166, 4294901760
      %1992 = vmatpush1.msra.mxu0 %v1991
      %1993 = vmatprep.subr.mxu0 0.0
      %1994 = vmatpush1.msra.mxu0 0.0
      %1995 = vmatprep.subr.mxu0 0.0
      %1996 = vmatpush1.msra.mxu0 0.0
      %1997 = vmatprep.subr.mxu0 0.0
      %1998 = vmatpush1.msra.mxu0 0.0
      %1999 = vmatprep.subr.mxu0 0.0
      %2000 = vmatpush1.msra.mxu0 0.0
      %2001 = vmatprep.subr.mxu0 0.0
      %2002 = vmatpush1.msra.mxu0 0.0
      %2003 = vmatprep.subr.mxu0 0.0
      %2004 = vmatpush1.msra.mxu0 0.0
      %2005 = vmatprep.subr.mxu0 0.0
      %2006 = vmatpush1.msra.mxu0 0.0
      %2007 = vmatprep.subr.mxu0 0.0
      %2008 = vmatpush1.msra.mxu0 0.0
      %2009 = vmatprep.subr.mxu0 0.0
      %2010 = vmatpush1.msra.mxu0 0.0
      %2011 = vmatprep.subr.mxu0 0.0
      %2012 = vmatpush1.msra.mxu0 0.0
      %2013 = vmatprep.subr.mxu0 0.0
      %2014 = vmatpush1.msra.mxu0 0.0
      %2015 = vmatprep.subr.mxu0 0.0
      %2016 = vmatpush1.msra.mxu0 0.0
      %2017 = vmatprep.subr.mxu0 0.0
      %2018 = vmatpush1.msra.mxu0 0.0
      %2019 = vmatprep.subr.mxu0 0.0
      %2020 = vmatpush1.msra.mxu0 0.0
      %2021 = vmatprep.subr.mxu0 0.0
      %2022 = vmatpush1.msra.mxu0 0.0
      %2023 = vmatprep.subr.mxu0 0.0
      %2024 = vmatpush1.msra.mxu0 0.0
      %2025 = vmatprep.subr.mxu0 0.0
      %2026 = vmatpush1.msra.mxu0 0.0
      %2027 = vmatprep.subr.mxu0 0.0
      %2028 = vmatpush1.msra.mxu0 0.0
      %2029 = vmatprep.subr.mxu0 0.0
      %2030 = vmatpush1.msra.mxu0 0.0
      %2031 = vmatprep.subr.mxu0 0.0
      %2032 = vmatpush1.msra.mxu0 0.0
      %2033 = vmatprep.subr.mxu0 0.0
      %2034 = vmatpush1.msra.mxu0 0.0
      %2035 = vmatprep.subr.mxu0 0.0
      %2036 = vmatpush1.msra.mxu0 0.0
      %2037 = vmatprep.subr.mxu0 0.0
      %2038 = vmatpush1.msra.mxu0 0.0
      %2039 = vmatprep.subr.mxu0 0.0
      %2040 = vmatpush1.msra.mxu0 0.0
      %2041 = vmatprep.subr.mxu0 0.0
      %2042 = vmatpush1.msra.mxu0 0.0
      %2043 = vmatprep.subr.mxu0 0.0
      %2044 = vmatpush1.msra.mxu0 0.0
      %2045 = vmatprep.subr.mxu0 0.0
      %2046 = vmatpush1.msra.mxu0 0.0
      %2047 = vmatprep.subr.mxu0 0.0
      %2048 = vmatpush1.msra.mxu0 0.0
      %2049 = vmatprep.subr.mxu0 0.0
      %2050 = vmatpush1.msra.mxu0 0.0
      %2051 = vmatprep.subr.mxu0 0.0
      %2052 = vmatpush1.msra.mxu0 0.0
      %2053 = vmatprep.mubr.f32.mxu0 0.0
      %v2054 = vand.u32 %v1386, 4294901760
      %v2055 = vsub.f32 %v1386, %v2054
      %v2056 = vand.u32 %v2055, 4294901760
      %v2057 = vsub.f32 %v2055, %v2056
      %v2058 = vand.u32 %v2057, 4294901760
      %2059 = vmatmul.mubr.f32.gmra.mrb[0].mxu0 %v2058
      %v2060 = vpop.f32.mrb[0].mxu0
      %v2061 = vadd.f32 0.0, %v2060
      %v2062 = vpop.f32.mrb[0].mxu0
      %2063 = vmatprep.mubr.f32.mxu0 0.0
      %v2064 = vand.u32 %v1388, 4294901760
      %v2065 = vsub.f32 %v1388, %v2064
      %v2066 = vand.u32 %v2065, 4294901760
      %v2067 = vsub.f32 %v2065, %v2066
      %v2068 = vand.u32 %v2067, 4294901760
      %2069 = vmatmul.mubr.f32.gmra.mrb[0].mxu0 %v2068
      %v2070 = vpop.f32.mrb[0].mxu0
      %v2071 = vadd.f32 0.0, %v2070
      %v2072 = vpop.f32.mrb[0].mxu0
      %2073 = vmatprep.mubr.f32.mxu0 0.0
      %v2074 = vand.u32 %v1390, 4294901760
      %v2075 = vsub.f32 %v1390, %v2074
      %v2076 = vand.u32 %v2075, 4294901760
      %v2077 = vsub.f32 %v2075, %v2076
      %v2078 = vand.u32 %v2077, 4294901760
      %2079 = vmatmul.mubr.f32.gmra.mrb[0].mxu0 %v2078
      %v2080 = vpop.f32.mrb[0].mxu0
      %v2081 = vadd.f32 0.0, %v2080
      %v2082 = vpop.f32.mrb[0].mxu0
      %2083 = vmatprep.mubr.f32.mxu0 0.0
      %v2084 = vand.u32 %v1392, 4294901760
      %v2085 = vsub.f32 %v1392, %v2084
      %v2086 = vand.u32 %v2085, 4294901760
      %v2087 = vsub.f32 %v2085, %v2086
      %v2088 = vand.u32 %v2087, 4294901760
      %2089 = vmatmul.mubr.f32.gmra.mrb[0].mxu0 %v2088
      %v2090 = vpop.f32.mrb[0].mxu0
      %v2091 = vadd.f32 0.0, %v2090
      %v2092 = vpop.f32.mrb[0].mxu0
      %2093 = vdwg.mxu0
      %2094 = vmatprep.subr.mxu0 0.0
      %v2095 = vand.u32 %v165, 4294901760
      %v2096 = vsub.f32 %v165, %v2095
      %v2097 = vand.u32 %v2096, 4294901760
      %v2098 = vsub.f32 %v2096, %v2097
      %v2099 = vand.u32 %v2098, 4294901760
      %2100 = vmatpush1.msra.mxu0 %v2099
      %2101 = vmatprep.subr.mxu0 0.0
      %v2102 = vand.u32 %v166, 4294901760
      %v2103 = vsub.f32 %v166, %v2102
      %v2104 = vand.u32 %v2103, 4294901760
      %v2105 = vsub.f32 %v2103, %v2104
      %v2106 = vand.u32 %v2105, 4294901760
      %2107 = vmatpush1.msra.mxu0 %v2106
      %2108 = vmatprep.subr.mxu0 0.0
      %2109 = vmatpush1.msra.mxu0 0.0
      %2110 = vmatprep.subr.mxu0 0.0
      %2111 = vmatpush1.msra.mxu0 0.0
      %2112 = vmatprep.subr.mxu0 0.0
      %2113 = vmatpush1.msra.mxu0 0.0
      %2114 = vmatprep.subr.mxu0 0.0
      %2115 = vmatpush1.msra.mxu0 0.0
      %2116 = vmatprep.subr.mxu0 0.0
      %2117 = vmatpush1.msra.mxu0 0.0
      %2118 = vmatprep.subr.mxu0 0.0
      %2119 = vmatpush1.msra.mxu0 0.0
      %2120 = vmatprep.subr.mxu0 0.0
      %2121 = vmatpush1.msra.mxu0 0.0
      %2122 = vmatprep.subr.mxu0 0.0
      %2123 = vmatpush1.msra.mxu0 0.0
      %2124 = vmatprep.subr.mxu0 0.0
      %2125 = vmatpush1.msra.mxu0 0.0
      %2126 = vmatprep.subr.mxu0 0.0
      %2127 = vmatpush1.msra.mxu0 0.0
      %2128 = vmatprep.subr.mxu0 0.0
      %2129 = vmatpush1.msra.mxu0 0.0
      %2130 = vmatprep.subr.mxu0 0.0
      %2131 = vmatpush1.msra.mxu0 0.0
      %2132 = vmatprep.subr.mxu0 0.0
      %2133 = vmatpush1.msra.mxu0 0.0
      %2134 = vmatprep.subr.mxu0 0.0
      %2135 = vmatpush1.msra.mxu0 0.0
      %2136 = vmatprep.subr.mxu0 0.0
      %2137 = vmatpush1.msra.mxu0 0.0
      %2138 = vmatprep.subr.mxu0 0.0
      %2139 = vmatpush1.msra.mxu0 0.0
      %2140 = vmatprep.subr.mxu0 0.0
      %2141 = vmatpush1.msra.mxu0 0.0
      %2142 = vmatprep.subr.mxu0 0.0
      %2143 = vmatpush1.msra.mxu0 0.0
      %2144 = vmatprep.subr.mxu0 0.0
      %2145 = vmatpush1.msra.mxu0 0.0
      %2146 = vmatprep.subr.mxu0 0.0
      %2147 = vmatpush1.msra.mxu0 0.0
      %2148 = vmatprep.subr.mxu0 0.0
      %2149 = vmatpush1.msra.mxu0 0.0
      %2150 = vmatprep.subr.mxu0 0.0
      %2151 = vmatpush1.msra.mxu0 0.0
      %2152 = vmatprep.subr.mxu0 0.0
      %2153 = vmatpush1.msra.mxu0 0.0
      %2154 = vmatprep.subr.mxu0 0.0
      %2155 = vmatpush1.msra.mxu0 0.0
      %2156 = vmatprep.subr.mxu0 0.0
      %2157 = vmatpush1.msra.mxu0 0.0
      %2158 = vmatprep.subr.mxu0 0.0
      %2159 = vmatpush1.msra.mxu0 0.0
      %2160 = vmatprep.subr.mxu0 0.0
      %2161 = vmatpush1.msra.mxu0 0.0
      %2162 = vmatprep.subr.mxu0 0.0
      %2163 = vmatpush1.msra.mxu0 0.0
      %2164 = vmatprep.subr.mxu0 0.0
      %2165 = vmatpush1.msra.mxu0 0.0
      %2166 = vmatprep.subr.mxu0 0.0
      %2167 = vmatpush1.msra.mxu0 0.0
      %2168 = vmatprep.mubr.f32.mxu0 0.0
      %v2169 = vand.u32 %v1386, 4294901760
      %2170 = vmatmul.mubr.f32.gmra.mrb[0].mxu0 %v2169
      %v2171 = vpop.f32.mrb[0].mxu0
      %v2172 = vadd.f32 %v2061, %v2171
      %v2173 = vpop.f32.mrb[0].mxu0
      %2174 = vmatprep.mubr.f32.mxu0 0.0
      %v2175 = vand.u32 %v1388, 4294901760
      %2176 = vmatmul.mubr.f32.gmra.mrb[0].mxu0 %v2175
      %v2177 = vpop.f32.mrb[0].mxu0
      %v2178 = vadd.f32 %v2071, %v2177
      %v2179 = vpop.f32.mrb[0].mxu0
      %2180 = vmatprep.mubr.f32.mxu0 0.0
      %v2181 = vand.u32 %v1390, 4294901760
      %2182 = vmatmul.mubr.f32.gmra.mrb[0].mxu0 %v2181
      %v2183 = vpop.f32.mrb[0].mxu0
      %v2184 = vadd.f32 %v2081, %v2183
      %v2185 = vpop.f32.mrb[0].mxu0
      %2186 = vmatprep.mubr.f32.mxu0 0.0
      %v2187 = vand.u32 %v1392, 4294901760
      %2188 = vmatmul.mubr.f32.gmra.mrb[0].mxu0 %v2187
      %v2189 = vpop.f32.mrb[0].mxu0
      %v2190 = vadd.f32 %v2091, %v2189
      %v2191 = vpop.f32.mrb[0].mxu0
      %2192 = vdwg.mxu0
      %2193 = vmatprep.subr.mxu0 0.0
      %v2194 = vand.u32 %v165, 4294901760
      %v2195 = vsub.f32 %v165, %v2194
      %2196 = vmatpush1.msra.mxu0 %v2195
      %2197 = vmatprep.subr.mxu0 0.0
      %v2198 = vand.u32 %v166, 4294901760
      %v2199 = vsub.f32 %v166, %v2198
      %2200 = vmatpush1.msra.mxu0 %v2199
      %2201 = vmatprep.subr.mxu0 0.0
      %2202 = vmatpush1.msra.mxu0 0.0
      %2203 = vmatprep.subr.mxu0 0.0
      %2204 = vmatpush1.msra.mxu0 0.0
      %2205 = vmatprep.subr.mxu0 0.0
      %2206 = vmatpush1.msra.mxu0 0.0
      %2207 = vmatprep.subr.mxu0 0.0
      %2208 = vmatpush1.msra.mxu0 0.0
      %2209 = vmatprep.subr.mxu0 0.0
      %2210 = vmatpush1.msra.mxu0 0.0
      %2211 = vmatprep.subr.mxu0 0.0
      %2212 = vmatpush1.msra.mxu0 0.0
      %2213 = vmatprep.subr.mxu0 0.0
      %2214 = vmatpush1.msra.mxu0 0.0
      %2215 = vmatprep.subr.mxu0 0.0
      %2216 = vmatpush1.msra.mxu0 0.0
      %2217 = vmatprep.subr.mxu0 0.0
      %2218 = vmatpush1.msra.mxu0 0.0
      %2219 = vmatprep.subr.mxu0 0.0
      %2220 = vmatpush1.msra.mxu0 0.0
      %2221 = vmatprep.subr.mxu0 0.0
      %2222 = vmatpush1.msra.mxu0 0.0
      %2223 = vmatprep.subr.mxu0 0.0
      %2224 = vmatpush1.msra.mxu0 0.0
      %2225 = vmatprep.subr.mxu0 0.0
      %2226 = vmatpush1.msra.mxu0 0.0
      %2227 = vmatprep.subr.mxu0 0.0
      %2228 = vmatpush1.msra.mxu0 0.0
      %2229 = vmatprep.subr.mxu0 0.0
      %2230 = vmatpush1.msra.mxu0 0.0
      %2231 = vmatprep.subr.mxu0 0.0
      %2232 = vmatpush1.msra.mxu0 0.0
      %2233 = vmatprep.subr.mxu0 0.0
      %2234 = vmatpush1.msra.mxu0 0.0
      %2235 = vmatprep.subr.mxu0 0.0
      %2236 = vmatpush1.msra.mxu0 0.0
      %2237 = vmatprep.subr.mxu0 0.0
      %2238 = vmatpush1.msra.mxu0 0.0
      %2239 = vmatprep.subr.mxu0 0.0
      %2240 = vmatpush1.msra.mxu0 0.0
      %2241 = vmatprep.subr.mxu0 0.0
      %2242 = vmatpush1.msra.mxu0 0.0
      %2243 = vmatprep.subr.mxu0 0.0
      %2244 = vmatpush1.msra.mxu0 0.0
      %2245 = vmatprep.subr.mxu0 0.0
      %2246 = vmatpush1.msra.mxu0 0.0
      %2247 = vmatprep.subr.mxu0 0.0
      %2248 = vmatpush1.msra.mxu0 0.0
      %2249 = vmatprep.subr.mxu0 0.0
      %2250 = vmatpush1.msra.mxu0 0.0
      %2251 = vmatprep.subr.mxu0 0.0
      %2252 = vmatpush1.msra.mxu0 0.0
      %2253 = vmatprep.subr.mxu0 0.0
      %2254 = vmatpush1.msra.mxu0 0.0
      %2255 = vmatprep.subr.mxu0 0.0
      %2256 = vmatpush1.msra.mxu0 0.0
      %2257 = vmatprep.subr.mxu0 0.0
      %2258 = vmatpush1.msra.mxu0 0.0
      %2259 = vmatprep.subr.mxu0 0.0
      %2260 = vmatpush1.msra.mxu0 0.0
      %2261 = vmatprep.mubr.f32.mxu0 0.0
      %v2262 = vand.u32 %v1386, 4294901760
      %v2263 = vsub.f32 %v1386, %v2262
      %2264 = vmatmul.mubr.f32.gmra.mrb[0].mxu0 %v2263
      %v2265 = vpop.f32.mrb[0].mxu0
      %v2266 = vadd.f32 %v2172, %v2265
      %v2267 = vpop.f32.mrb[0].mxu0
      %2268 = vmatprep.mubr.f32.mxu0 0.0
      %v2269 = vand.u32 %v1388, 4294901760
      %v2270 = vsub.f32 %v1388, %v2269
      %2271 = vmatmul.mubr.f32.gmra.mrb[0].mxu0 %v2270
      %v2272 = vpop.f32.mrb[0].mxu0
      %v2273 = vadd.f32 %v2178, %v2272
      %v2274 = vpop.f32.mrb[0].mxu0
      %2275 = vmatprep.mubr.f32.mxu0 0.0
      %v2276 = vand.u32 %v1390, 4294901760
      %v2277 = vsub.f32 %v1390, %v2276
      %2278 = vmatmul.mubr.f32.gmra.mrb[0].mxu0 %v2277
      %v2279 = vpop.f32.mrb[0].mxu0
      %v2280 = vadd.f32 %v2184, %v2279
      %v2281 = vpop.f32.mrb[0].mxu0
      %2282 = vmatprep.mubr.f32.mxu0 0.0
      %v2283 = vand.u32 %v1392, 4294901760
      %v2284 = vsub.f32 %v1392, %v2283
      %2285 = vmatmul.mubr.f32.gmra.mrb[0].mxu0 %v2284
      %v2286 = vpop.f32.mrb[0].mxu0
      %v2287 = vadd.f32 %v2190, %v2286
      %v2288 = vpop.f32.mrb[0].mxu0
      %2289 = vdwg.mxu0
      %2290 = vmatprep.subr.mxu0 0.0
      %v2291 = vand.u32 %v165, 4294901760
      %2292 = vmatpush1.msra.mxu0 %v2291
      %2293 = vmatprep.subr.mxu0 0.0
      %v2294 = vand.u32 %v166, 4294901760
      %2295 = vmatpush1.msra.mxu0 %v2294
      %2296 = vmatprep.subr.mxu0 0.0
      %2297 = vmatpush1.msra.mxu0 0.0
      %2298 = vmatprep.subr.mxu0 0.0
      %2299 = vmatpush1.msra.mxu0 0.0
      %2300 = vmatprep.subr.mxu0 0.0
      %2301 = vmatpush1.msra.mxu0 0.0
      %2302 = vmatprep.subr.mxu0 0.0
      %2303 = vmatpush1.msra.mxu0 0.0
      %2304 = vmatprep.subr.mxu0 0.0
      %2305 = vmatpush1.msra.mxu0 0.0
      %2306 = vmatprep.subr.mxu0 0.0
      %2307 = vmatpush1.msra.mxu0 0.0
      %2308 = vmatprep.subr.mxu0 0.0
      %2309 = vmatpush1.msra.mxu0 0.0
      %2310 = vmatprep.subr.mxu0 0.0
      %2311 = vmatpush1.msra.mxu0 0.0
      %2312 = vmatprep.subr.mxu0 0.0
      %2313 = vmatpush1.msra.mxu0 0.0
      %2314 = vmatprep.subr.mxu0 0.0
      %2315 = vmatpush1.msra.mxu0 0.0
      %2316 = vmatprep.subr.mxu0 0.0
      %2317 = vmatpush1.msra.mxu0 0.0
      %2318 = vmatprep.subr.mxu0 0.0
      %2319 = vmatpush1.msra.mxu0 0.0
      %2320 = vmatprep.subr.mxu0 0.0
      %2321 = vmatpush1.msra.mxu0 0.0
      %2322 = vmatprep.subr.mxu0 0.0
      %2323 = vmatpush1.msra.mxu0 0.0
      %2324 = vmatprep.subr.mxu0 0.0
      %2325 = vmatpush1.msra.mxu0 0.0
      %2326 = vmatprep.subr.mxu0 0.0
      %2327 = vmatpush1.msra.mxu0 0.0
      %2328 = vmatprep.subr.mxu0 0.0
      %2329 = vmatpush1.msra.mxu0 0.0
      %2330 = vmatprep.subr.mxu0 0.0
      %2331 = vmatpush1.msra.mxu0 0.0
      %2332 = vmatprep.subr.mxu0 0.0
      %2333 = vmatpush1.msra.mxu0 0.0
      %2334 = vmatprep.subr.mxu0 0.0
      %2335 = vmatpush1.msra.mxu0 0.0
      %2336 = vmatprep.subr.mxu0 0.0
      %2337 = vmatpush1.msra.mxu0 0.0
      %2338 = vmatprep.subr.mxu0 0.0
      %2339 = vmatpush1.msra.mxu0 0.0
      %2340 = vmatprep.subr.mxu0 0.0
      %2341 = vmatpush1.msra.mxu0 0.0
      %2342 = vmatprep.subr.mxu0 0.0
      %2343 = vmatpush1.msra.mxu0 0.0
      %2344 = vmatprep.subr.mxu0 0.0
      %2345 = vmatpush1.msra.mxu0 0.0
      %2346 = vmatprep.subr.mxu0 0.0
      %2347 = vmatpush1.msra.mxu0 0.0
      %2348 = vmatprep.subr.mxu0 0.0
      %2349 = vmatpush1.msra.mxu0 0.0
      %2350 = vmatprep.subr.mxu0 0.0
      %2351 = vmatpush1.msra.mxu0 0.0
      %2352 = vmatprep.subr.mxu0 0.0
      %2353 = vmatpush1.msra.mxu0 0.0
      %2354 = vmatprep.subr.mxu0 0.0
      %2355 = vmatpush1.msra.mxu0 0.0
      %2356 = vmatprep.mubr.f32.mxu0 0.0
      %v2357 = vand.u32 %v1386, 4294901760
      %v2358 = vsub.f32 %v1386, %v2357
      %v2359 = vand.u32 %v2358, 4294901760
      %2360 = vmatmul.mubr.f32.gmra.mrb[0].mxu0 %v2359
      %v2361 = vpop.f32.mrb[0].mxu0
      %v2362 = vadd.f32 %v2266, %v2361
      %v2363 = vpop.f32.mrb[0].mxu0
      %2364 = vmatprep.mubr.f32.mxu0 0.0
      %v2365 = vand.u32 %v1388, 4294901760
      %v2366 = vsub.f32 %v1388, %v2365
      %v2367 = vand.u32 %v2366, 4294901760
      %2368 = vmatmul.mubr.f32.gmra.mrb[0].mxu0 %v2367
      %v2369 = vpop.f32.mrb[0].mxu0
      %v2370 = vadd.f32 %v2273, %v2369
      %v2371 = vpop.f32.mrb[0].mxu0
      %2372 = vmatprep.mubr.f32.mxu0 0.0
      %v2373 = vand.u32 %v1390, 4294901760
      %v2374 = vsub.f32 %v1390, %v2373
      %v2375 = vand.u32 %v2374, 4294901760
      %2376 = vmatmul.mubr.f32.gmra.mrb[0].mxu0 %v2375
      %v2377 = vpop.f32.mrb[0].mxu0
      %v2378 = vadd.f32 %v2280, %v2377
      %v2379 = vpop.f32.mrb[0].mxu0
      %2380 = vmatprep.mubr.f32.mxu0 0.0
      %v2381 = vand.u32 %v1392, 4294901760
      %v2382 = vsub.f32 %v1392, %v2381
      %v2383 = vand.u32 %v2382, 4294901760
      %2384 = vmatmul.mubr.f32.gmra.mrb[0].mxu0 %v2383
      %v2385 = vpop.f32.mrb[0].mxu0
      %v2386 = vadd.f32 %v2287, %v2385
      %v2387 = vpop.f32.mrb[0].mxu0
      %2388 = vdwg.mxu0
      %2389 = vmatprep.subr.mxu0 0.0
      %v2390 = vand.u32 %v165, 4294901760
      %v2391 = vsub.f32 %v165, %v2390
      %v2392 = vand.u32 %v2391, 4294901760
      %2393 = vmatpush1.msra.mxu0 %v2392
      %2394 = vmatprep.subr.mxu0 0.0
      %v2395 = vand.u32 %v166, 4294901760
      %v2396 = vsub.f32 %v166, %v2395
      %v2397 = vand.u32 %v2396, 4294901760
      %2398 = vmatpush1.msra.mxu0 %v2397
      %2399 = vmatprep.subr.mxu0 0.0
      %2400 = vmatpush1.msra.mxu0 0.0
      %2401 = vmatprep.subr.mxu0 0.0
      %2402 = vmatpush1.msra.mxu0 0.0
      %2403 = vmatprep.subr.mxu0 0.0
      %2404 = vmatpush1.msra.mxu0 0.0
      %2405 = vmatprep.subr.mxu0 0.0
      %2406 = vmatpush1.msra.mxu0 0.0
      %2407 = vmatprep.subr.mxu0 0.0
      %2408 = vmatpush1.msra.mxu0 0.0
      %2409 = vmatprep.subr.mxu0 0.0
      %2410 = vmatpush1.msra.mxu0 0.0
      %2411 = vmatprep.subr.mxu0 0.0
      %2412 = vmatpush1.msra.mxu0 0.0
      %2413 = vmatprep.subr.mxu0 0.0
      %2414 = vmatpush1.msra.mxu0 0.0
      %2415 = vmatprep.subr.mxu0 0.0
      %2416 = vmatpush1.msra.mxu0 0.0
      %2417 = vmatprep.subr.mxu0 0.0
      %2418 = vmatpush1.msra.mxu0 0.0
      %2419 = vmatprep.subr.mxu0 0.0
      %2420 = vmatpush1.msra.mxu0 0.0
      %2421 = vmatprep.subr.mxu0 0.0
      %2422 = vmatpush1.msra.mxu0 0.0
      %2423 = vmatprep.subr.mxu0 0.0
      %2424 = vmatpush1.msra.mxu0 0.0
      %2425 = vmatprep.subr.mxu0 0.0
      %2426 = vmatpush1.msra.mxu0 0.0
      %2427 = vmatprep.subr.mxu0 0.0
      %2428 = vmatpush1.msra.mxu0 0.0
      %2429 = vmatprep.subr.mxu0 0.0
      %2430 = vmatpush1.msra.mxu0 0.0
      %2431 = vmatprep.subr.mxu0 0.0
      %2432 = vmatpush1.msra.mxu0 0.0
      %2433 = vmatprep.subr.mxu0 0.0
      %2434 = vmatpush1.msra.mxu0 0.0
      %2435 = vmatprep.subr.mxu0 0.0
      %2436 = vmatpush1.msra.mxu0 0.0
      %2437 = vmatprep.subr.mxu0 0.0
      %2438 = vmatpush1.msra.mxu0 0.0
      %2439 = vmatprep.subr.mxu0 0.0
      %2440 = vmatpush1.msra.mxu0 0.0
      %2441 = vmatprep.subr.mxu0 0.0
      %2442 = vmatpush1.msra.mxu0 0.0
      %2443 = vmatprep.subr.mxu0 0.0
      %2444 = vmatpush1.msra.mxu0 0.0
      %2445 = vmatprep.subr.mxu0 0.0
      %2446 = vmatpush1.msra.mxu0 0.0
      %2447 = vmatprep.subr.mxu0 0.0
      %2448 = vmatpush1.msra.mxu0 0.0
      %2449 = vmatprep.subr.mxu0 0.0
      %2450 = vmatpush1.msra.mxu0 0.0
      %2451 = vmatprep.subr.mxu0 0.0
      %2452 = vmatpush1.msra.mxu0 0.0
      %2453 = vmatprep.subr.mxu0 0.0
      %2454 = vmatpush1.msra.mxu0 0.0
      %2455 = vmatprep.subr.mxu0 0.0
      %2456 = vmatpush1.msra.mxu0 0.0
      %2457 = vmatprep.subr.mxu0 0.0
      %2458 = vmatpush1.msra.mxu0 0.0
      %2459 = vmatprep.mubr.f32.mxu0 0.0
      %v2460 = vand.u32 %v1386, 4294901760
      %2461 = vmatmul.mubr.f32.gmra.mrb[0].mxu0 %v2460
      %v2462 = vpop.f32.mrb[0].mxu0
      %v2463 = vadd.f32 %v2362, %v2462
      %v2464 = vpop.f32.mrb[0].mxu0
      %2465 = vmatprep.mubr.f32.mxu0 0.0
      %v2466 = vand.u32 %v1388, 4294901760
      %2467 = vmatmul.mubr.f32.gmra.mrb[0].mxu0 %v2466
      %v2468 = vpop.f32.mrb[0].mxu0
      %v2469 = vadd.f32 %v2370, %v2468
      %v2470 = vpop.f32.mrb[0].mxu0
      %2471 = vmatprep.mubr.f32.mxu0 0.0
      %v2472 = vand.u32 %v1390, 4294901760
      %2473 = vmatmul.mubr.f32.gmra.mrb[0].mxu0 %v2472
      %v2474 = vpop.f32.mrb[0].mxu0
      %v2475 = vadd.f32 %v2378, %v2474
      %v2476 = vpop.f32.mrb[0].mxu0
      %2477 = vmatprep.mubr.f32.mxu0 0.0
      %v2478 = vand.u32 %v1392, 4294901760
      %2479 = vmatmul.mubr.f32.gmra.mrb[0].mxu0 %v2478
      %v2480 = vpop.f32.mrb[0].mxu0
      %v2481 = vadd.f32 %v2386, %v2480
      %v2482 = vpop.f32.mrb[0].mxu0
      %2483 = vdwg.mxu0
      %2484 = vmatprep.subr.mxu0 0.0
      %v2485 = vand.u32 %v165, 4294901760
      %2486 = vmatpush1.msra.mxu0 %v2485
      %2487 = vmatprep.subr.mxu0 0.0
      %v2488 = vand.u32 %v166, 4294901760
      %2489 = vmatpush1.msra.mxu0 %v2488
      %2490 = vmatprep.subr.mxu0 0.0
      %2491 = vmatpush1.msra.mxu0 0.0
      %2492 = vmatprep.subr.mxu0 0.0
      %2493 = vmatpush1.msra.mxu0 0.0
      %2494 = vmatprep.subr.mxu0 0.0
      %2495 = vmatpush1.msra.mxu0 0.0
      %2496 = vmatprep.subr.mxu0 0.0
      %2497 = vmatpush1.msra.mxu0 0.0
      %2498 = vmatprep.subr.mxu0 0.0
      %2499 = vmatpush1.msra.mxu0 0.0
      %2500 = vmatprep.subr.mxu0 0.0
      %2501 = vmatpush1.msra.mxu0 0.0
      %2502 = vmatprep.subr.mxu0 0.0
      %2503 = vmatpush1.msra.mxu0 0.0
      %2504 = vmatprep.subr.mxu0 0.0
      %2505 = vmatpush1.msra.mxu0 0.0
      %2506 = vmatprep.subr.mxu0 0.0
      %2507 = vmatpush1.msra.mxu0 0.0
      %2508 = vmatprep.subr.mxu0 0.0
      %2509 = vmatpush1.msra.mxu0 0.0
      %2510 = vmatprep.subr.mxu0 0.0
      %2511 = vmatpush1.msra.mxu0 0.0
      %2512 = vmatprep.subr.mxu0 0.0
      %2513 = vmatpush1.msra.mxu0 0.0
      %2514 = vmatprep.subr.mxu0 0.0
      %2515 = vmatpush1.msra.mxu0 0.0
      %2516 = vmatprep.subr.mxu0 0.0
      %2517 = vmatpush1.msra.mxu0 0.0
      %2518 = vmatprep.subr.mxu0 0.0
      %2519 = vmatpush1.msra.mxu0 0.0
      %2520 = vmatprep.subr.mxu0 0.0
      %2521 = vmatpush1.msra.mxu0 0.0
      %2522 = vmatprep.subr.mxu0 0.0
      %2523 = vmatpush1.msra.mxu0 0.0
      %2524 = vmatprep.subr.mxu0 0.0
      %2525 = vmatpush1.msra.mxu0 0.0
      %2526 = vmatprep.subr.mxu0 0.0
      %2527 = vmatpush1.msra.mxu0 0.0
      %2528 = vmatprep.subr.mxu0 0.0
      %2529 = vmatpush1.msra.mxu0 0.0
      %2530 = vmatprep.subr.mxu0 0.0
      %2531 = vmatpush1.msra.mxu0 0.0
      %2532 = vmatprep.subr.mxu0 0.0
      %2533 = vmatpush1.msra.mxu0 0.0
      %2534 = vmatprep.subr.mxu0 0.0
      %2535 = vmatpush1.msra.mxu0 0.0
      %2536 = vmatprep.subr.mxu0 0.0
      %2537 = vmatpush1.msra.mxu0 0.0
      %2538 = vmatprep.subr.mxu0 0.0
      %2539 = vmatpush1.msra.mxu0 0.0
      %2540 = vmatprep.subr.mxu0 0.0
      %2541 = vmatpush1.msra.mxu0 0.0
      %2542 = vmatprep.subr.mxu0 0.0
      %2543 = vmatpush1.msra.mxu0 0.0
      %2544 = vmatprep.subr.mxu0 0.0
      %2545 = vmatpush1.msra.mxu0 0.0
      %2546 = vmatprep.subr.mxu0 0.0
      %2547 = vmatpush1.msra.mxu0 0.0
      %2548 = vmatprep.subr.mxu0 0.0
      %2549 = vmatpush1.msra.mxu0 0.0
      %2550 = vmatprep.mubr.f32.mxu0 0.0
      %v2551 = vand.u32 %v1386, 4294901760
      %2552 = vmatmul.mubr.f32.gmra.mrb[0].mxu0 %v2551
      %v2553 = vpop.f32.mrb[0].mxu0
      %v2554 = vadd.f32 %v2463, %v2553
      %v2555 = vpop.f32.mrb[0].mxu0
      %2556 = vmatprep.mubr.f32.mxu0 0.0
      %v2557 = vand.u32 %v1388, 4294901760
      %2558 = vmatmul.mubr.f32.gmra.mrb[0].mxu0 %v2557
      %v2559 = vpop.f32.mrb[0].mxu0
      %v2560 = vadd.f32 %v2469, %v2559
      %v2561 = vpop.f32.mrb[0].mxu0
      %2562 = vmatprep.mubr.f32.mxu0 0.0
      %v2563 = vand.u32 %v1390, 4294901760
      %2564 = vmatmul.mubr.f32.gmra.mrb[0].mxu0 %v2563
      %v2565 = vpop.f32.mrb[0].mxu0
      %v2566 = vadd.f32 %v2475, %v2565
      %v2567 = vpop.f32.mrb[0].mxu0
      %2568 = vmatprep.mubr.f32.mxu0 0.0
      %v2569 = vand.u32 %v1392, 4294901760
      %2570 = vmatmul.mubr.f32.gmra.mrb[0].mxu0 %v2569
      %v2571 = vpop.f32.mrb[0].mxu0
      %v2572 = vadd.f32 %v2481, %v2571
      %v2573 = vpop.f32.mrb[0].mxu0
      %2574 = vdwg.mxu0
      %s2575 = scalar_lea.vmem %s147, 96
      %2576 = vst.msk [vmem:[%s2575] sm:$0xff] %vm772, %v2554
      %2577 = vst.msk [vmem:[%s2575 + $0x8] sm:$0xff] %vm772, %v2560
      %2578 = vst.msk [vmem:[%s2575 + $0x10] sm:$0xff] %vm772, %v2566
      %2579 = vst.msk [vmem:[%s2575 + $0x18] sm:$0xff] %vm772, %v2572
      %p2580 = scmp.lt.s32.totalorder %s16, 1
      %s2581 = scalar_select %p2580, %s16, 1
      %p2582 = scmp.lt.s32.totalorder %s17, 0
      %s2583 = scalar_select %p2582, %s17, 0
      %s2584 = smul.addr %s2581, 16
      %s2585 = sadd.s32 %s2583, %s2584
      %s2586 = smul.addr %s2585, 8
      %s2587 = scalar_lea.vmem %s1, %s2586
      // Predicated region
      $region25: #{psi_forward.1} parent=23 // pred_check
        %p2588 = pneg %p72
      $region26: #{psi_forward.1} parent=23 // pred_check_branch
        %2590 = sbr.rel (%p2588) target = $region28
      $region27: #{psi_forward.1} parent=23 // pred_region
        _
      $region28: #{psi_forward.1} parent=23 // pred_fallthru
        _
    $region24: #{psi_forward.1} parent=5 // pred_fallthru
      _
    %p2591 = scmp.le.s32.totalorder 2, %s7
    // Predicated region
    $region29: #{psi_forward.1} parent=5 // pred_check
      %p2592 = pneg %p2591
    $region30: #{psi_forward.1} parent=5 // pred_check_branch
      %2594 = sbr.rel (%p2592) target = $region32
    $region31: #{psi_forward.1} parent=5 // pred_region
      %s2595 = ssub.s32 %s7, 2
      // Predicated region
      $region33: #{psi_forward.1} parent=31 // pred_check
        %p2596 = pneg %p78
      $region34: #{psi_forward.1} parent=31 // pred_check_branch
        %2598 = sbr.rel (%p2596) target = $region36
      $region35: #{psi_forward.1} parent=31 // pred_region
        %p2599 = scmp.lt.s32.totalorder %s18, 1
        %s2600 = scalar_select %p2599, %s18, 1
        %p2601 = scmp.lt.s32.totalorder %s19, 0
        %s2602 = scalar_select %p2601, %s19, 0
        %s2603 = smul.addr %s2600, 16
        %s2604 = sadd.s32 %s2602, %s2603
        %s2605 = smul.addr %s2604, 8
        %s2606 = scalar_lea.vmem %s1, %s2605
      $region36: #{psi_forward.1} parent=31 // pred_fallthru
        _
    $region32: #{psi_forward.1} parent=5 // pred_fallthru
      _
  $region6: #{psi_forward.1} parent=0 // loop_footer
    %s11 = sadd.s32 1, %s7
  $region7: #{psi_forward.1} parent=0 // loop_footer_branch
    %6 = sbr.rel target = $region3
  $region8: #{psi_forward.1} parent=0 // loop_exit
    _

</llo_original>
